<compile_context>
chip_gen: v5e
topology: v5e:2x2
jax: 0.10.0
libtpu: 0.0.40
codegen_flags: <defaults>
</compile_context>

<pallas_src>
import functools
import math

import jax
import jax.numpy as jnp
import numpy as np
from jax.experimental import pallas as pl
from jax.experimental.pallas import tpu as pltpu


def _mha_kernel(x_ref, wqkv_ref, wfc_ref, gamma_ref, beta_ref, out_ref,
                relayout_ref, *, batch, feature_dim, seq, model_dim,
                headers, k_dim, v_dim, eps):
    BF = batch * feature_dim
    S = seq
    M = model_dim
    BFS = BF * S
    Hdk = headers * k_dim
    Hdv = headers * v_dim

    x = x_ref[...]                              # (3*BFS, M) f32, rows=[xq;xk;xv]
    residual = x[:BFS]                          # (BFS, M) f32  (== xq rows)

    # ---- fused Q/K/V projection: ONE MXU push over the stacked operands ----
    # [xq; xk; xv] @ [wq | wk | wv]; only the diagonal blocks are used.
    qkv = jnp.dot(x.astype(jnp.bfloat16), wqkv_ref[...].astype(jnp.bfloat16),
                  preferred_element_type=jnp.float32)   # (3*BFS, 2*Hdk + Hdv)
    scale = 1.0 / math.sqrt(k_dim)
    q = qkv[:BFS, :Hdk] * scale                 # pre-scale q once (f32 VPU)
    k = qkv[BFS:2 * BFS, Hdk:2 * Hdk]
    v = qkv[2 * BFS:, 2 * Hdk:]

    # Leading-dim splits only (minor dims untouched -> layout no-ops).
    q3 = q.reshape(BF, S, Hdk)
    k3 = k.reshape(BF, S, Hdk)
    v3 = v.reshape(BF, S, Hdv)

    # ---- per-head attention; contexts gathered into one (BFS, Hdv) slab ----
    ctx_heads = []
    for h in range(headers):                    # static unroll, headers is tiny
        qh = q3[:, :, h * k_dim:(h + 1) * k_dim].astype(jnp.bfloat16)
        kh = k3[:, :, h * k_dim:(h + 1) * k_dim].astype(jnp.bfloat16)
        vh = v3[:, :, h * v_dim:(h + 1) * v_dim].astype(jnp.bfloat16)

        # (b,f)-batched scores; dk contracted directly (no materialized k^T).
        s = jnp.einsum("bqd,bkd->bqk", qh, kh,
                       preferred_element_type=jnp.float32)       # (BF, Sq, Sk)

        # Softmax over the *query* axis (== dim=3 of the torch 5-D scores).
        # f32 throughout; exact divide per perf review (no approx reciprocal).
        m = jnp.max(s, axis=1, keepdims=True)
        e = jnp.exp(s - m)
        attn = e / jnp.sum(e, axis=1, keepdims=True)

        ctx = jnp.einsum("bqk,bkd->bqd", attn.astype(jnp.bfloat16), vh,
                         preferred_element_type=jnp.float32)     # (BF, Sq, dv)
        ctx_heads.append(ctx)

    ctx_all = jnp.concatenate(ctx_heads, axis=-1)   # (BF, S, Hdv), lane concat
    ctx_flat = ctx_all.reshape(BFS, Hdv)            # leading-dim merge only

    # ---- single merged fc matmul + residual (added once) -------------------
    out = residual + jnp.dot(ctx_flat.astype(jnp.bfloat16),
                             wfc_ref[...].astype(jnp.bfloat16),
                             preferred_element_type=jnp.float32)  # (BFS, M)

    # ---- LayerNorm over model_dim (biased variance, f32) -------------------
    mean = jnp.mean(out, axis=-1, keepdims=True)
    var = jnp.mean((out - mean) ** 2, axis=-1, keepdims=True)
    y = (out - mean) * jax.lax.rsqrt(var + eps) * gamma_ref[...] + beta_ref[...]

    # ---- lane-dense store: (BFS, M) -> (BF, S*M) ----------------------------
    # Relayout sublanes->lanes through a small VMEM scratch (store + per-row
    # loads + lane concat), then store one dense (BF, S*M) slab (unmasked vst).
    relayout_ref[...] = y.reshape(BF, S, M)          # leading-dim split only
    dense = jnp.concatenate([relayout_ref[:, i, :] for i in range(S)], axis=-1)
    out_ref[...] = dense.astype(out_ref.dtype)       # (BF, S*M) = (8, 256)


@functools.partial(jax.jit, static_argnames=("headers", "k_dim", "v_dim", "eps"))
def multi_head_attention(xq, xk, xv, wq, wk, wv, wfc, gamma, beta,
                         *, headers, k_dim, v_dim, eps=1e-5):
    B, F, S, M = xq.shape
    BF = B * F
    BFS = BF * S
    Hdk, Hdv = headers * k_dim, headers * v_dim

    # Stack activations row-wise and projection weights column-wise so the
    # kernel runs ONE fused QKV matmul (cheap HBM-side ops, done once).
    x = jnp.concatenate([xq.reshape(BFS, M), xk.reshape(BFS, M),
                         xv.reshape(BFS, M)], axis=0)            # (3*BFS, M)
    w_qkv = jnp.concatenate([wq, wk, wv], axis=1)                # (M, 2*Hdk+Hdv)

    kernel = functools.partial(
        _mha_kernel, batch=B, feature_dim=F, seq=S, model_dim=M,
        headers=headers, k_dim=k_dim, v_dim=v_dim, eps=eps)

    vmem = pl.BlockSpec(memory_space=pltpu.MemorySpace.VMEM)

    flops = (2 * 3 * BFS * M * (2 * Hdk + Hdv)        # fused QKV projection
             + 2 * BF * headers * S * S * k_dim       # scores
             + 2 * BF * headers * S * S * v_dim       # attn @ v
             + 2 * BFS * Hdv * M)                     # fc
    transcendentals = BF * headers * S * S            # exp
    bytes_accessed = 4 * (3 * BFS * M                 # stacked input
                          + M * (2 * Hdk + Hdv)       # fused qkv weight
                          + Hdv * M + 2 * M           # wfc, gamma, beta
                          + BFS * M)                  # output

    out = pl.pallas_call(
        kernel,
        out_shape=jax.ShapeDtypeStruct((BF, S * M), xq.dtype),   # lane-dense
        in_specs=[vmem] * 5,
        out_specs=vmem,
        scratch_shapes=[pltpu.VMEM((BF, S, M), jnp.float32)],
        cost_estimate=pl.CostEstimate(flops=flops,
                                      transcendentals=transcendentals,
                                      bytes_accessed=bytes_accessed),
    )(x, w_qkv, wfc, gamma, beta)
    # Same HBM bytes as (B, F, S, M) -> free metadata reshape.
    return out.reshape(B, F, S, M)


def _reference(xq, xk, xv, wq, wk, wv, wfc, gamma, beta,
               *, headers, k_dim, v_dim, eps=1e-5):
    """Pure-JAX replica of the PyTorch forward pass, for verification."""
    B, F, S, M = xq.shape
    q = (xq @ wq).reshape(B, F, S, headers, k_dim).transpose(0, 1, 3, 2, 4)
    k = (xk @ wk).reshape(B, F, S, headers, k_dim).transpose(0, 1, 3, 2, 4)
    v = (xv @ wv).reshape(B, F, S, headers, v_dim).transpose(0, 1, 3, 2, 4)
    scores = jnp.einsum("bfhqd,bfhkd->bfhqk", q, k) / np.sqrt(k_dim)
    attn = jax.nn.softmax(scores, axis=3)             # dim=3 as in the module
    context = jnp.einsum("bfhqk,bfhkd->bfhqd", attn, v)
    context = context.transpose(0, 1, 3, 2, 4).reshape(B, F, S, headers * v_dim)
    out = context @ wfc + xq
    mean = jnp.mean(out, axis=-1, keepdims=True)
    var = jnp.mean((out - mean) ** 2, axis=-1, keepdims=True)
    return (out - mean) * jax.lax.rsqrt(var + eps) * gamma + beta


if __name__ == "__main__":
    # Module hyper-params (small shapes consistent with the module).
    model_dim, k_dim, v_dim, headers, feature_dim = 32, 16, 16, 2, 4
    batch, seq = 2, 8

    key = jax.random.PRNGKey(0)
    ks = jax.random.split(key, 7)

    # Activations: (B, feature_dim, S, model_dim)
    xq = jax.random.normal(ks[0], (batch, feature_dim, seq, model_dim), jnp.float32)
    xk = jax.random.normal(ks[1], (batch, feature_dim, seq, model_dim), jnp.float32)
    xv = jax.random.normal(ks[2], (batch, feature_dim, seq, model_dim), jnp.float32)

    # Linear weights, pre-transposed to (in, out); bias=False in the reference.
    sq = 1.0 / math.sqrt(model_dim)
    wq = jax.random.uniform(ks[3], (model_dim, headers * k_dim), jnp.float32, -sq, sq)
    wk = jax.random.uniform(ks[4], (model_dim, headers * k_dim), jnp.float32, -sq, sq)
    wv = jax.random.uniform(ks[5], (model_dim, headers * v_dim), jnp.float32, -sq, sq)
    sf = 1.0 / math.sqrt(headers * v_dim)
    wfc = jax.random.uniform(ks[6], (headers * v_dim, model_dim), jnp.float32, -sf, sf)

    # LayerNorm params (default torch init), 2-D for TPU layout friendliness.
    gamma = jnp.ones((1, model_dim), jnp.float32)
    beta = jnp.zeros((1, model_dim), jnp.float32)

    out = multi_head_attention(xq, xk, xv, wq, wk, wv, wfc, gamma, beta,
                               headers=headers, k_dim=k_dim, v_dim=v_dim)
    out = jax.block_until_ready(out)

    ref = _reference(xq, xk, xv, wq, wk, wv, wfc, gamma, beta,
                     headers=headers, k_dim=k_dim, v_dim=v_dim)
    # Tolerance covers the explicit bf16 MXU operands in the kernel (intended
    # per review) vs. the XLA-default-precision f32 reference; softmax and
    # LayerNorm are exact f32 in both.
    np.testing.assert_allclose(np.asarray(out), np.asarray(ref),
                               rtol=2e-2, atol=2e-2)
    print("KERNEL_OK")
</pallas_src>

<mosaic_0001>
module attributes {stable_mosaic.version = 11 : i64} {
  func.func @_mha_kernel(%arg0: memref<192x32xf32, #tpu.memory_space<vmem>>, %arg1: memref<32x96xf32, #tpu.memory_space<vmem>>, %arg2: memref<32x32xf32, #tpu.memory_space<vmem>>, %arg3: memref<1x32xf32, #tpu.memory_space<vmem>>, %arg4: memref<1x32xf32, #tpu.memory_space<vmem>>, %arg5: memref<8x256xf32, #tpu.memory_space<vmem>>, %arg6: memref<8x8x32xf32, #tpu.memory_space<vmem>>) attributes {dimension_semantics = [], scalar_prefetch = 0 : i64, scratch_operands = 1 : i64, tpu.core_type = #tpu.core_type<tc>} {
    %c0 = arith.constant 0 : index
    %c0_0 = arith.constant 0 : index
    %0 = vector.load %arg0[%c0, %c0_0] : memref<192x32xf32, #tpu.memory_space<vmem>>, vector<192x32xf32>
    %1 = vector.extract_strided_slice %0 {offsets = [0, 0], sizes = [64, 32], strides = [1, 1]} : vector<192x32xf32> to vector<64x32xf32>
    %2 = arith.truncf %0 : vector<192x32xf32> to vector<192x32xbf16>
    %c0_1 = arith.constant 0 : index
    %c0_2 = arith.constant 0 : index
    %3 = vector.load %arg1[%c0_1, %c0_2] : memref<32x96xf32, #tpu.memory_space<vmem>>, vector<32x96xf32>
    %4 = arith.truncf %3 : vector<32x96xf32> to vector<32x96xbf16>
    %cst = arith.constant dense<0.000000e+00> : vector<192x96xf32>
    %5 = tpu.matmul %2, %4, %cst {dimension_numbers = #tpu.dot_dimension_numbers<[1], [0], [0], [1], [0, 0, 1, 1], [], []>} : vector<192x32xbf16>, vector<32x96xbf16>, vector<192x96xf32> -> vector<192x96xf32>
    %6 = vector.extract_strided_slice %5 {offsets = [0, 0], sizes = [64, 32], strides = [1, 1]} : vector<192x96xf32> to vector<64x32xf32>
    %cst_3 = arith.constant 2.500000e-01 : f32
    %7 = vector.broadcast %cst_3 : f32 to vector<64x32xf32>
    %8 = arith.mulf %6, %7 : vector<64x32xf32>
    %9 = vector.extract_strided_slice %5 {offsets = [64, 32], sizes = [64, 32], strides = [1, 1]} : vector<192x96xf32> to vector<64x32xf32>
    %10 = vector.extract_strided_slice %5 {offsets = [128, 64], sizes = [64, 32], strides = [1, 1]} : vector<192x96xf32> to vector<64x32xf32>
    %11 = vector.shape_cast %8 : vector<64x32xf32> to vector<8x8x32xf32>
    %12 = vector.shape_cast %9 : vector<64x32xf32> to vector<8x8x32xf32>
    %13 = vector.shape_cast %10 : vector<64x32xf32> to vector<8x8x32xf32>
    %14 = vector.extract_strided_slice %11 {offsets = [0, 0, 0], sizes = [8, 8, 16], strides = [1, 1, 1]} : vector<8x8x32xf32> to vector<8x8x16xf32>
    %15 = arith.truncf %14 : vector<8x8x16xf32> to vector<8x8x16xbf16>
    %16 = vector.extract_strided_slice %12 {offsets = [0, 0, 0], sizes = [8, 8, 16], strides = [1, 1, 1]} : vector<8x8x32xf32> to vector<8x8x16xf32>
    %17 = arith.truncf %16 : vector<8x8x16xf32> to vector<8x8x16xbf16>
    %18 = vector.extract_strided_slice %13 {offsets = [0, 0, 0], sizes = [8, 8, 16], strides = [1, 1, 1]} : vector<8x8x32xf32> to vector<8x8x16xf32>
    %19 = arith.truncf %18 : vector<8x8x16xf32> to vector<8x8x16xbf16>
    "tpu.trace_start"() <{level = 10 : i32, message = "bqd,bkd->bqk"}> : () -> ()
    %cst_4 = arith.constant dense<0.000000e+00> : vector<8x8x8xf32>
    %20 = tpu.matmul %15, %17, %cst_4 {dimension_numbers = #tpu.dot_dimension_numbers<[2], [2], [1], [1], [0, 0, 0, 1, 1, 1], [0], [0]>} : vector<8x8x16xbf16>, vector<8x8x16xbf16>, vector<8x8x8xf32> -> vector<8x8x8xf32>
    "tpu.trace_stop"() : () -> ()
    %cst_5 = arith.constant dense<0xFF800000> : vector<8x8xf32>
    %21 = vector.multi_reduction <maximumf>, %20, %cst_5 [1] : vector<8x8x8xf32> to vector<8x8xf32>
    %22 = vector.shape_cast %21 : vector<8x8xf32> to vector<8x1x8xf32>
    %23 = vector.broadcast %22 : vector<8x1x8xf32> to vector<8x8x8xf32>
    %24 = arith.subf %20, %23 : vector<8x8x8xf32>
    %25 = math.exp %24 : vector<8x8x8xf32>
    %cst_6 = arith.constant dense<0.000000e+00> : vector<8x8xf32>
    %26 = vector.multi_reduction <add>, %25, %cst_6 [1] : vector<8x8x8xf32> to vector<8x8xf32>
    %27 = vector.shape_cast %26 : vector<8x8xf32> to vector<8x1x8xf32>
    %28 = vector.broadcast %27 : vector<8x1x8xf32> to vector<8x8x8xf32>
    %29 = arith.divf %25, %28 : vector<8x8x8xf32>
    %30 = arith.truncf %29 : vector<8x8x8xf32> to vector<8x8x8xbf16>
    "tpu.trace_start"() <{level = 10 : i32, message = "bqk,bkd->bqd"}> : () -> ()
    %cst_7 = arith.constant dense<0.000000e+00> : vector<8x8x16xf32>
    %31 = tpu.matmul %30, %19, %cst_7 {dimension_numbers = #tpu.dot_dimension_numbers<[2], [1], [1], [2], [0, 0, 0, 1, 1, 2], [0], [0]>} : vector<8x8x8xbf16>, vector<8x8x16xbf16>, vector<8x8x16xf32> -> vector<8x8x16xf32>
    "tpu.trace_stop"() : () -> ()
    %32 = vector.extract_strided_slice %11 {offsets = [0, 0, 16], sizes = [8, 8, 16], strides = [1, 1, 1]} : vector<8x8x32xf32> to vector<8x8x16xf32>
    %33 = arith.truncf %32 : vector<8x8x16xf32> to vector<8x8x16xbf16>
    %34 = vector.extract_strided_slice %12 {offsets = [0, 0, 16], sizes = [8, 8, 16], strides = [1, 1, 1]} : vector<8x8x32xf32> to vector<8x8x16xf32>
    %35 = arith.truncf %34 : vector<8x8x16xf32> to vector<8x8x16xbf16>
    %36 = vector.extract_strided_slice %13 {offsets = [0, 0, 16], sizes = [8, 8, 16], strides = [1, 1, 1]} : vector<8x8x32xf32> to vector<8x8x16xf32>
    %37 = arith.truncf %36 : vector<8x8x16xf32> to vector<8x8x16xbf16>
    "tpu.trace_start"() <{level = 10 : i32, message = "bqd,bkd->bqk"}> : () -> ()
    %cst_8 = arith.constant dense<0.000000e+00> : vector<8x8x8xf32>
    %38 = tpu.matmul %33, %35, %cst_8 {dimension_numbers = #tpu.dot_dimension_numbers<[2], [2], [1], [1], [0, 0, 0, 1, 1, 1], [0], [0]>} : vector<8x8x16xbf16>, vector<8x8x16xbf16>, vector<8x8x8xf32> -> vector<8x8x8xf32>
    "tpu.trace_stop"() : () -> ()
    %cst_9 = arith.constant dense<0xFF800000> : vector<8x8xf32>
    %39 = vector.multi_reduction <maximumf>, %38, %cst_9 [1] : vector<8x8x8xf32> to vector<8x8xf32>
    %40 = vector.shape_cast %39 : vector<8x8xf32> to vector<8x1x8xf32>
    %41 = vector.broadcast %40 : vector<8x1x8xf32> to vector<8x8x8xf32>
    %42 = arith.subf %38, %41 : vector<8x8x8xf32>
    %43 = math.exp %42 : vector<8x8x8xf32>
    %cst_10 = arith.constant dense<0.000000e+00> : vector<8x8xf32>
    %44 = vector.multi_reduction <add>, %43, %cst_10 [1] : vector<8x8x8xf32> to vector<8x8xf32>
    %45 = vector.shape_cast %44 : vector<8x8xf32> to vector<8x1x8xf32>
    %46 = vector.broadcast %45 : vector<8x1x8xf32> to vector<8x8x8xf32>
    %47 = arith.divf %43, %46 : vector<8x8x8xf32>
    %48 = arith.truncf %47 : vector<8x8x8xf32> to vector<8x8x8xbf16>
    "tpu.trace_start"() <{level = 10 : i32, message = "bqk,bkd->bqd"}> : () -> ()
    %cst_11 = arith.constant dense<0.000000e+00> : vector<8x8x16xf32>
    %49 = tpu.matmul %48, %37, %cst_11 {dimension_numbers = #tpu.dot_dimension_numbers<[2], [1], [1], [2], [0, 0, 0, 1, 1, 2], [0], [0]>} : vector<8x8x8xbf16>, vector<8x8x16xbf16>, vector<8x8x16xf32> -> vector<8x8x16xf32>
    "tpu.trace_stop"() : () -> ()
    %50 = tpu.concatenate %31, %49 in 2 : vector<8x8x16xf32>, vector<8x8x16xf32> -> vector<8x8x32xf32>
    %51 = vector.shape_cast %50 : vector<8x8x32xf32> to vector<64x32xf32>
    %52 = arith.truncf %51 : vector<64x32xf32> to vector<64x32xbf16>
    %c0_12 = arith.constant 0 : index
    %c0_13 = arith.constant 0 : index
    %53 = vector.load %arg2[%c0_12, %c0_13] : memref<32x32xf32, #tpu.memory_space<vmem>>, vector<32x32xf32>
    %54 = arith.truncf %53 : vector<32x32xf32> to vector<32x32xbf16>
    %cst_14 = arith.constant dense<0.000000e+00> : vector<64x32xf32>
    %55 = tpu.matmul %52, %54, %cst_14 {dimension_numbers = #tpu.dot_dimension_numbers<[1], [0], [0], [1], [0, 0, 1, 1], [], []>} : vector<64x32xbf16>, vector<32x32xbf16>, vector<64x32xf32> -> vector<64x32xf32>
    %56 = arith.addf %1, %55 : vector<64x32xf32>
    %cst_15 = arith.constant dense<0.000000e+00> : vector<64xf32>
    %57 = vector.multi_reduction <add>, %56, %cst_15 [1] : vector<64x32xf32> to vector<64xf32>
    %58 = vector.shape_cast %57 : vector<64xf32> to vector<64x1xf32>
    %cst_16 = arith.constant 3.200000e+01 : f32
    %59 = vector.broadcast %cst_16 : f32 to vector<64x1xf32>
    %60 = arith.divf %58, %59 : vector<64x1xf32>
    %61 = vector.broadcast %60 : vector<64x1xf32> to vector<64x32xf32>
    %62 = arith.subf %56, %61 : vector<64x32xf32>
    %63 = arith.mulf %62, %62 : vector<64x32xf32>
    %cst_17 = arith.constant dense<0.000000e+00> : vector<64xf32>
    %64 = vector.multi_reduction <add>, %63, %cst_17 [1] : vector<64x32xf32> to vector<64xf32>
    %65 = vector.shape_cast %64 : vector<64xf32> to vector<64x1xf32>
    %cst_18 = arith.constant 3.200000e+01 : f32
    %66 = vector.broadcast %cst_18 : f32 to vector<64x1xf32>
    %67 = arith.divf %65, %66 : vector<64x1xf32>
    %68 = vector.broadcast %60 : vector<64x1xf32> to vector<64x32xf32>
    %69 = arith.subf %56, %68 : vector<64x32xf32>
    %cst_19 = arith.constant 9.99999974E-6 : f32
    %70 = vector.broadcast %cst_19 : f32 to vector<64x1xf32>
    %71 = arith.addf %67, %70 : vector<64x1xf32>
    %72 = math.rsqrt %71 : vector<64x1xf32>
    %73 = vector.broadcast %72 : vector<64x1xf32> to vector<64x32xf32>
    %74 = arith.mulf %69, %73 : vector<64x32xf32>
    %c0_20 = arith.constant 0 : index
    %c0_21 = arith.constant 0 : index
    %75 = vector.load %arg3[%c0_20, %c0_21] : memref<1x32xf32, #tpu.memory_space<vmem>>, vector<1x32xf32>
    %76 = vector.broadcast %75 : vector<1x32xf32> to vector<64x32xf32>
    %77 = arith.mulf %74, %76 : vector<64x32xf32>
    %c0_22 = arith.constant 0 : index
    %c0_23 = arith.constant 0 : index
    %78 = vector.load %arg4[%c0_22, %c0_23] : memref<1x32xf32, #tpu.memory_space<vmem>>, vector<1x32xf32>
    %79 = vector.broadcast %78 : vector<1x32xf32> to vector<64x32xf32>
    %80 = arith.addf %77, %79 : vector<64x32xf32>
    %81 = vector.shape_cast %80 : vector<64x32xf32> to vector<8x8x32xf32>
    %c0_24 = arith.constant 0 : index
    %c0_25 = arith.constant 0 : index
    %c0_26 = arith.constant 0 : index
    %82 = vector.load %arg6[%c0_24, %c0_25, %c0_26] : memref<8x8x32xf32, #tpu.memory_space<vmem>>, vector<8x8x32xf32>
    tpu.vector_store %arg6[%c0_24, %c0_25, %c0_26], %81 {strides = array<i32>} : memref<8x8x32xf32, #tpu.memory_space<vmem>>, vector<8x8x32xf32>,
    %c0_27 = arith.constant 0 : index
    %c0_28 = arith.constant 0 : index
    %c0_29 = arith.constant 0 : index
    %83 = vector.load %arg6[%c0_27, %c0_28, %c0_29] : memref<8x8x32xf32, #tpu.memory_space<vmem>>, vector<8x1x32xf32>
    %84 = vector.shape_cast %83 : vector<8x1x32xf32> to vector<8x32xf32>
    %c0_30 = arith.constant 0 : index
    %c1 = arith.constant 1 : index
    %c0_31 = arith.constant 0 : index
    %85 = vector.load %arg6[%c0_30, %c1, %c0_31] : memref<8x8x32xf32, #tpu.memory_space<vmem>>, vector<8x1x32xf32>
    %86 = vector.shape_cast %85 : vector<8x1x32xf32> to vector<8x32xf32>
    %c0_32 = arith.constant 0 : index
    %c2 = arith.constant 2 : index
    %c0_33 = arith.constant 0 : index
    %87 = vector.load %arg6[%c0_32, %c2, %c0_33] : memref<8x8x32xf32, #tpu.memory_space<vmem>>, vector<8x1x32xf32>
    %88 = vector.shape_cast %87 : vector<8x1x32xf32> to vector<8x32xf32>
    %c0_34 = arith.constant 0 : index
    %c3 = arith.constant 3 : index
    %c0_35 = arith.constant 0 : index
    %89 = vector.load %arg6[%c0_34, %c3, %c0_35] : memref<8x8x32xf32, #tpu.memory_space<vmem>>, vector<8x1x32xf32>
    %90 = vector.shape_cast %89 : vector<8x1x32xf32> to vector<8x32xf32>
    %c0_36 = arith.constant 0 : index
    %c4 = arith.constant 4 : index
    %c0_37 = arith.constant 0 : index
    %91 = vector.load %arg6[%c0_36, %c4, %c0_37] : memref<8x8x32xf32, #tpu.memory_space<vmem>>, vector<8x1x32xf32>
    %92 = vector.shape_cast %91 : vector<8x1x32xf32> to vector<8x32xf32>
    %c0_38 = arith.constant 0 : index
    %c5 = arith.constant 5 : index
    %c0_39 = arith.constant 0 : index
    %93 = vector.load %arg6[%c0_38, %c5, %c0_39] : memref<8x8x32xf32, #tpu.memory_space<vmem>>, vector<8x1x32xf32>
    %94 = vector.shape_cast %93 : vector<8x1x32xf32> to vector<8x32xf32>
    %c0_40 = arith.constant 0 : index
    %c6 = arith.constant 6 : index
    %c0_41 = arith.constant 0 : index
    %95 = vector.load %arg6[%c0_40, %c6, %c0_41] : memref<8x8x32xf32, #tpu.memory_space<vmem>>, vector<8x1x32xf32>
    %96 = vector.shape_cast %95 : vector<8x1x32xf32> to vector<8x32xf32>
    %c0_42 = arith.constant 0 : index
    %c7 = arith.constant 7 : index
    %c0_43 = arith.constant 0 : index
    %97 = vector.load %arg6[%c0_42, %c7, %c0_43] : memref<8x8x32xf32, #tpu.memory_space<vmem>>, vector<8x1x32xf32>
    %98 = vector.shape_cast %97 : vector<8x1x32xf32> to vector<8x32xf32>
    %99 = tpu.concatenate %84, %86, %88, %90, %92, %94, %96, %98 in 1 : vector<8x32xf32>, vector<8x32xf32>, vector<8x32xf32>, vector<8x32xf32>, vector<8x32xf32>, vector<8x32xf32>, vector<8x32xf32>, vector<8x32xf32> -> vector<8x256xf32>
    %c0_44 = arith.constant 0 : index
    %c0_45 = arith.constant 0 : index
    %100 = vector.load %arg5[%c0_44, %c0_45] : memref<8x256xf32, #tpu.memory_space<vmem>>, vector<8x256xf32>
    tpu.vector_store %arg5[%c0_44, %c0_45], %99 {strides = array<i32>} : memref<8x256xf32, #tpu.memory_space<vmem>>, vector<8x256xf32>,
    return
  }
}

</mosaic_0001>

<llo_original>
// kernel: multi_head_attention.1
$region0: #{multi_head_attention.1}
  #allocation0 [shape = 'u32[]', space=smem, size = 0x4, offset = 0x4, fixed_abs, tag = 'smem constant byte address 0x4 - core index']
  #allocation1 [shape = 'u32[72,128]{1,0:T(1,128)}', space=vmem, size = 0x9000, scoped, tag = 'internal scratch']
  #allocation2 [shape = 'f32[8,8,32]{2,1,0:T(8,128)}', space=vmem, size = 0x8000, scoped, tag = 'scratch operand']
  %s0 = inlined_call_operand.vmem [shape: f32[192,32], index: 0, kind: input, shape index: {}]
  %s1 = inlined_call_operand.vmem [shape: f32[32,96], index: 1, kind: input, shape index: {}]
  %s2 = inlined_call_operand.vmem [shape: f32[32,32], index: 2, kind: input, shape index: {}]
  %s3 = inlined_call_operand.vmem [shape: f32[1,32], index: 3, kind: input, shape index: {}]
  %s4 = inlined_call_operand.vmem [shape: f32[1,32], index: 4, kind: input, shape index: {}]
  %s5 = inlined_call_operand.vmem [shape: f32[8,256], index: 5, kind: output, shape index: {}]
  %s6 = sld [smem:[#allocation0]]
  $region30: #{multi_head_attention.1} parent=0
    _
  %s8 = ssub.s32 1, %s6
  %s9 = scalar_select 0, %s8, %s6
  // Predicated region
  $region2: #{multi_head_attention.1} parent=0 // pred_check
    _
  $region3: #{multi_head_attention.1} parent=0 // pred_check_branch
    %11 = sbr.rel (0) target = $region5
  $region4: #{multi_head_attention.1} parent=0 // pred_region
    _
  $region5: #{multi_head_attention.1} parent=0 // pred_fallthru
    _
  // Predicated region
  $region6: #{multi_head_attention.1} parent=0 // pred_check
    _
  $region7: #{multi_head_attention.1} parent=0 // pred_check_branch
    %13 = sbr.rel (0) target = $region9
  $region8: #{multi_head_attention.1} parent=0 // pred_region
    _
  $region9: #{multi_head_attention.1} parent=0 // pred_fallthru
    _
  // Predicated region
  $region10: #{multi_head_attention.1} parent=0 // pred_check
    _
  $region11: #{multi_head_attention.1} parent=0 // pred_check_branch
    %15 = sbr.rel (0) target = $region13
  $region12: #{multi_head_attention.1} parent=0 // pred_region
    _
  $region13: #{multi_head_attention.1} parent=0 // pred_fallthru
    _
  // Predicated region
  $region14: #{multi_head_attention.1} parent=0 // pred_check
    _
  $region15: #{multi_head_attention.1} parent=0 // pred_check_branch
    %17 = sbr.rel (0) target = $region17
  $region16: #{multi_head_attention.1} parent=0 // pred_region
    _
  $region17: #{multi_head_attention.1} parent=0 // pred_fallthru
    _
  // Predicated region
  $region18: #{multi_head_attention.1} parent=0 // pred_check
    _
  $region19: #{multi_head_attention.1} parent=0 // pred_check_branch
    %19 = sbr.rel (0) target = $region21
  $region20: #{multi_head_attention.1} parent=0 // pred_region
    _
  $region21: #{multi_head_attention.1} parent=0 // pred_fallthru
    _
  %v21 = vld [vmem:[%s0] sm:$0xff]
  %v22 = vld [vmem:[%s0 + $0x8] sm:$0xff]
  %v23 = vld [vmem:[%s0 + $0x10] sm:$0xff]
  %v24 = vld [vmem:[%s0 + $0x18] sm:$0xff]
  %v25 = vld [vmem:[%s0 + $0x20] sm:$0xff]
  %v26 = vld [vmem:[%s0 + $0x28] sm:$0xff]
  %v27 = vld [vmem:[%s0 + $0x30] sm:$0xff]
  %v28 = vld [vmem:[%s0 + $0x38] sm:$0xff]
  %v29 = vld [vmem:[%s0 + $0x40] sm:$0xff]
  %v30 = vld [vmem:[%s0 + $0x48] sm:$0xff]
  %v31 = vld [vmem:[%s0 + $0x50] sm:$0xff]
  %v32 = vld [vmem:[%s0 + $0x58] sm:$0xff]
  %v33 = vld [vmem:[%s0 + $0x60] sm:$0xff]
  %v34 = vld [vmem:[%s0 + $0x68] sm:$0xff]
  %v35 = vld [vmem:[%s0 + $0x70] sm:$0xff]
  %v36 = vld [vmem:[%s0 + $0x78] sm:$0xff]
  %v37 = vld [vmem:[%s0 + $0x80] sm:$0xff]
  %v38 = vld [vmem:[%s0 + $0x88] sm:$0xff]
  %v39 = vld [vmem:[%s0 + $0x90] sm:$0xff]
  %v40 = vld [vmem:[%s0 + $0x98] sm:$0xff]
  %v41 = vld [vmem:[%s0 + $0xa0] sm:$0xff]
  %v42 = vld [vmem:[%s0 + $0xa8] sm:$0xff]
  %v43 = vld [vmem:[%s0 + $0xb0] sm:$0xff]
  %v44 = vld [vmem:[%s0 + $0xb8] sm:$0xff]
  %v45 = vpack.c.bf16 %v22, %v21
  %v46 = vpack.c.bf16 %v24, %v23
  %v47 = vpack.c.bf16 %v26, %v25
  %v48 = vpack.c.bf16 %v28, %v27
  %v49 = vpack.c.bf16 %v30, %v29
  %v50 = vpack.c.bf16 %v32, %v31
  %v51 = vpack.c.bf16 %v34, %v33
  %v52 = vpack.c.bf16 %v36, %v35
  %v53 = vpack.c.bf16 %v38, %v37
  %v54 = vpack.c.bf16 %v40, %v39
  %v55 = vpack.c.bf16 %v42, %v41
  %v56 = vpack.c.bf16 %v44, %v43
  %v57 = vld [vmem:[%s1] sm:$0xff]
  %v58 = vld [vmem:[%s1 + $0x8] sm:$0xff]
  %v59 = vld [vmem:[%s1 + $0x10] sm:$0xff]
  %v60 = vld [vmem:[%s1 + $0x18] sm:$0xff]
  %v61 = vpack.c.bf16 %v58, %v57
  %v62 = vpack.c.bf16 %v60, %v59
  %vm63 = vcmask 261120
  %v65 = vsel %vm63, %v45, 0
  %v68 = vsel %vm63, %v46, 0
  %v71 = vsel %vm63, %v47, 0
  %v74 = vsel %vm63, %v48, 0
  %v77 = vsel %vm63, %v49, 0
  %v80 = vsel %vm63, %v50, 0
  %v83 = vsel %vm63, %v51, 0
  %v86 = vsel %vm63, %v52, 0
  %v89 = vsel %vm63, %v53, 0
  %v92 = vsel %vm63, %v54, 0
  %v95 = vsel %vm63, %v55, 0
  %v98 = vsel %vm63, %v56, 0
  %100 = vmatpush.bf16.msra.mxu0 0
  %101 = vmatpush.bf16.msra.mxu0 0
  %102 = vmatpush.bf16.msra.mxu0 0
  %103 = vmatpush.bf16.msra.mxu0 0
  %104 = vmatpush.bf16.msra.mxu0 0
  %105 = vmatpush.bf16.msra.mxu0 0
  %106 = vmatpush.bf16.msra.mxu0 %v62
  %107 = vmatpush.bf16.msra.mxu0 %v61
  %108 = vmatmul.bf16.gmra.mxu0 %v65
  %v109 = vpop.f32.mrf.mxu0
  %v110 = vadd.f32 0.0, %v109
  %v111 = vpop.f32.mrf.mxu0
  %v112 = vadd.f32 0.0, %v111
  %113 = vmatmul.bf16.gmra.mxu0 %v68
  %v114 = vpop.f32.mrf.mxu0
  %v115 = vadd.f32 0.0, %v114
  %v116 = vpop.f32.mrf.mxu0
  %v117 = vadd.f32 0.0, %v116
  %118 = vmatmul.bf16.gmra.mxu0 %v71
  %v119 = vpop.f32.mrf.mxu0
  %v120 = vadd.f32 0.0, %v119
  %v121 = vpop.f32.mrf.mxu0
  %v122 = vadd.f32 0.0, %v121
  %123 = vmatmul.bf16.gmra.mxu0 %v74
  %v124 = vpop.f32.mrf.mxu0
  %v125 = vadd.f32 0.0, %v124
  %v126 = vpop.f32.mrf.mxu0
  %v127 = vadd.f32 0.0, %v126
  %128 = vmatmul.bf16.gmra.mxu0 %v77
  %v129 = vpop.f32.mrf.mxu0
  %v130 = vadd.f32 0.0, %v129
  %v131 = vpop.f32.mrf.mxu0
  %v132 = vadd.f32 0.0, %v131
  %133 = vmatmul.bf16.gmra.mxu0 %v80
  %v134 = vpop.f32.mrf.mxu0
  %v135 = vadd.f32 0.0, %v134
  %v136 = vpop.f32.mrf.mxu0
  %v137 = vadd.f32 0.0, %v136
  %138 = vmatmul.bf16.gmra.mxu0 %v83
  %v139 = vpop.f32.mrf.mxu0
  %v140 = vadd.f32 0.0, %v139
  %v141 = vpop.f32.mrf.mxu0
  %v142 = vadd.f32 0.0, %v141
  %143 = vmatmul.bf16.gmra.mxu0 %v86
  %v144 = vpop.f32.mrf.mxu0
  %v145 = vadd.f32 0.0, %v144
  %v146 = vpop.f32.mrf.mxu0
  %v147 = vadd.f32 0.0, %v146
  %148 = vmatmul.bf16.gmra.mxu0 %v89
  %v149 = vpop.f32.mrf.mxu0
  %v150 = vadd.f32 0.0, %v149
  %v151 = vpop.f32.mrf.mxu0
  %v152 = vadd.f32 0.0, %v151
  %153 = vmatmul.bf16.gmra.mxu0 %v92
  %v154 = vpop.f32.mrf.mxu0
  %v155 = vadd.f32 0.0, %v154
  %v156 = vpop.f32.mrf.mxu0
  %v157 = vadd.f32 0.0, %v156
  %158 = vmatmul.bf16.gmra.mxu0 %v95
  %v159 = vpop.f32.mrf.mxu0
  %v160 = vadd.f32 0.0, %v159
  %v161 = vpop.f32.mrf.mxu0
  %v162 = vadd.f32 0.0, %v161
  %163 = vmatmul.bf16.gmra.mxu0 %v98
  %v164 = vpop.f32.mrf.mxu0
  %v165 = vadd.f32 0.0, %v164
  %v166 = vpop.f32.mrf.mxu0
  %v167 = vadd.f32 0.0, %v166
  %168 = vdwg.mxu0
  %v169 = vmul.f32 %v110, 0.25
  %v170 = vmul.f32 %v112, 0.25
  %v171 = vmul.f32 %v115, 0.25
  %v172 = vmul.f32 %v117, 0.25
  %v173 = vmul.f32 %v120, 0.25
  %v174 = vmul.f32 %v122, 0.25
  %v175 = vmul.f32 %v125, 0.25
  %v176 = vmul.f32 %v127, 0.25
  %v177 = vpack.c.bf16 %v169, %v169
  %v178 = vpack.c.bf16 %v170, %v170
  %v179 = vpack.c.bf16 %v171, %v171
  %v180 = vpack.c.bf16 %v172, %v172
  %v181 = vpack.c.bf16 %v173, %v173
  %v182 = vpack.c.bf16 %v174, %v174
  %v183 = vpack.c.bf16 %v175, %v175
  %v184 = vpack.c.bf16 %v176, %v176
  %v185 = vpack.c.bf16 %v130, %v130
  %v186 = vpack.c.bf16 %v132, %v132
  %v187 = vpack.c.bf16 %v135, %v135
  %v188 = vpack.c.bf16 %v137, %v137
  %v189 = vpack.c.bf16 %v140, %v140
  %v190 = vpack.c.bf16 %v142, %v142
  %v191 = vpack.c.bf16 %v145, %v145
  %v192 = vpack.c.bf16 %v147, %v147
  %v193 = vpack.c.bf16 %v150, %v150
  %v194 = vpack.c.bf16 %v152, %v152
  %v195 = vpack.c.bf16 %v155, %v155
  %v196 = vpack.c.bf16 %v157, %v157
  %v197 = vpack.c.bf16 %v160, %v160
  %v198 = vpack.c.bf16 %v162, %v162
  %v199 = vpack.c.bf16 %v165, %v165
  %v200 = vpack.c.bf16 %v167, %v167
  %v202 = vunpack.c.l.b16 %v185
  %v203 = vpack.c.b16 %v202, %v202
  %204 = vrot.lane.b32.xlu0 %v203, 96
  %v205 = vpop.permute.xlu0 %204
  %vm206 = vcmask 130048
  %v208 = vsel %vm206, %v177, 0
  %v211 = vsel %vm206, %v205, 0
  %213 = vmatpush.bf16.xpose.msra.mxu0 0
  %214 = vmatpush.bf16.xpose.msra.mxu0 0
  %215 = vmatpush.bf16.xpose.msra.mxu0 0
  %216 = vmatpush.bf16.xpose.msra.mxu0 0
  %217 = vmatpush.bf16.xpose.msra.mxu0 0
  %218 = vmatpush.bf16.xpose.msra.mxu0 0
  %219 = vmatpush.bf16.xpose.msra.mxu0 0
  %220 = vmatpush.bf16.xpose.msra.mxu0 %v211
  %221 = vmatmul.bf16.gmra.mxu0 %v208
  %v222 = vpop.f32.mrf.mxu0
  %v223 = vadd.f32 0.0, %v222
  %v224 = vpop.f32.mrf.mxu0
  %225 = vdwg.mxu0
  %v227 = vunpack.c.l.b16 %v186
  %v228 = vpack.c.b16 %v227, %v227
  %229 = vrot.lane.b32.xlu0 %v228, 96
  %v230 = vpop.permute.xlu0 %229
  %v232 = vsel %vm206, %v178, 0
  %v235 = vsel %vm206, %v230, 0
  %237 = vmatpush.bf16.xpose.msra.mxu0 0
  %238 = vmatpush.bf16.xpose.msra.mxu0 0
  %239 = vmatpush.bf16.xpose.msra.mxu0 0
  %240 = vmatpush.bf16.xpose.msra.mxu0 0
  %241 = vmatpush.bf16.xpose.msra.mxu0 0
  %242 = vmatpush.bf16.xpose.msra.mxu0 0
  %243 = vmatpush.bf16.xpose.msra.mxu0 0
  %244 = vmatpush.bf16.xpose.msra.mxu0 %v235
  %245 = vmatmul.bf16.gmra.mxu0 %v232
  %v246 = vpop.f32.mrf.mxu0
  %v247 = vadd.f32 0.0, %v246
  %v248 = vpop.f32.mrf.mxu0
  %249 = vdwg.mxu0
  %v251 = vunpack.c.l.b16 %v187
  %v252 = vpack.c.b16 %v251, %v251
  %253 = vrot.lane.b32.xlu0 %v252, 96
  %v254 = vpop.permute.xlu0 %253
  %v256 = vsel %vm206, %v179, 0
  %v259 = vsel %vm206, %v254, 0
  %261 = vmatpush.bf16.xpose.msra.mxu0 0
  %262 = vmatpush.bf16.xpose.msra.mxu0 0
  %263 = vmatpush.bf16.xpose.msra.mxu0 0
  %264 = vmatpush.bf16.xpose.msra.mxu0 0
  %265 = vmatpush.bf16.xpose.msra.mxu0 0
  %266 = vmatpush.bf16.xpose.msra.mxu0 0
  %267 = vmatpush.bf16.xpose.msra.mxu0 0
  %268 = vmatpush.bf16.xpose.msra.mxu0 %v259
  %269 = vmatmul.bf16.gmra.mxu0 %v256
  %v270 = vpop.f32.mrf.mxu0
  %v271 = vadd.f32 0.0, %v270
  %v272 = vpop.f32.mrf.mxu0
  %273 = vdwg.mxu0
  %v275 = vunpack.c.l.b16 %v188
  %v276 = vpack.c.b16 %v275, %v275
  %277 = vrot.lane.b32.xlu0 %v276, 96
  %v278 = vpop.permute.xlu0 %277
  %v280 = vsel %vm206, %v180, 0
  %v283 = vsel %vm206, %v278, 0
  %285 = vmatpush.bf16.xpose.msra.mxu0 0
  %286 = vmatpush.bf16.xpose.msra.mxu0 0
  %287 = vmatpush.bf16.xpose.msra.mxu0 0
  %288 = vmatpush.bf16.xpose.msra.mxu0 0
  %289 = vmatpush.bf16.xpose.msra.mxu0 0
  %290 = vmatpush.bf16.xpose.msra.mxu0 0
  %291 = vmatpush.bf16.xpose.msra.mxu0 0
  %292 = vmatpush.bf16.xpose.msra.mxu0 %v283
  %293 = vmatmul.bf16.gmra.mxu0 %v280
  %v294 = vpop.f32.mrf.mxu0
  %v295 = vadd.f32 0.0, %v294
  %v296 = vpop.f32.mrf.mxu0
  %297 = vdwg.mxu0
  %v299 = vunpack.c.l.b16 %v189
  %v300 = vpack.c.b16 %v299, %v299
  %301 = vrot.lane.b32.xlu0 %v300, 96
  %v302 = vpop.permute.xlu0 %301
  %v304 = vsel %vm206, %v181, 0
  %v307 = vsel %vm206, %v302, 0
  %309 = vmatpush.bf16.xpose.msra.mxu0 0
  %310 = vmatpush.bf16.xpose.msra.mxu0 0
  %311 = vmatpush.bf16.xpose.msra.mxu0 0
  %312 = vmatpush.bf16.xpose.msra.mxu0 0
  %313 = vmatpush.bf16.xpose.msra.mxu0 0
  %314 = vmatpush.bf16.xpose.msra.mxu0 0
  %315 = vmatpush.bf16.xpose.msra.mxu0 0
  %316 = vmatpush.bf16.xpose.msra.mxu0 %v307
  %317 = vmatmul.bf16.gmra.mxu0 %v304
  %v318 = vpop.f32.mrf.mxu0
  %v319 = vadd.f32 0.0, %v318
  %v320 = vpop.f32.mrf.mxu0
  %321 = vdwg.mxu0
  %v323 = vunpack.c.l.b16 %v190
  %v324 = vpack.c.b16 %v323, %v323
  %325 = vrot.lane.b32.xlu0 %v324, 96
  %v326 = vpop.permute.xlu0 %325
  %v328 = vsel %vm206, %v182, 0
  %v331 = vsel %vm206, %v326, 0
  %333 = vmatpush.bf16.xpose.msra.mxu0 0
  %334 = vmatpush.bf16.xpose.msra.mxu0 0
  %335 = vmatpush.bf16.xpose.msra.mxu0 0
  %336 = vmatpush.bf16.xpose.msra.mxu0 0
  %337 = vmatpush.bf16.xpose.msra.mxu0 0
  %338 = vmatpush.bf16.xpose.msra.mxu0 0
  %339 = vmatpush.bf16.xpose.msra.mxu0 0
  %340 = vmatpush.bf16.xpose.msra.mxu0 %v331
  %341 = vmatmul.bf16.gmra.mxu0 %v328
  %v342 = vpop.f32.mrf.mxu0
  %v343 = vadd.f32 0.0, %v342
  %v344 = vpop.f32.mrf.mxu0
  %345 = vdwg.mxu0
  %v347 = vunpack.c.l.b16 %v191
  %v348 = vpack.c.b16 %v347, %v347
  %349 = vrot.lane.b32.xlu0 %v348, 96
  %v350 = vpop.permute.xlu0 %349
  %v352 = vsel %vm206, %v183, 0
  %v355 = vsel %vm206, %v350, 0
  %357 = vmatpush.bf16.xpose.msra.mxu0 0
  %358 = vmatpush.bf16.xpose.msra.mxu0 0
  %359 = vmatpush.bf16.xpose.msra.mxu0 0
  %360 = vmatpush.bf16.xpose.msra.mxu0 0
  %361 = vmatpush.bf16.xpose.msra.mxu0 0
  %362 = vmatpush.bf16.xpose.msra.mxu0 0
  %363 = vmatpush.bf16.xpose.msra.mxu0 0
  %364 = vmatpush.bf16.xpose.msra.mxu0 %v355
  %365 = vmatmul.bf16.gmra.mxu0 %v352
  %v366 = vpop.f32.mrf.mxu0
  %v367 = vadd.f32 0.0, %v366
  %v368 = vpop.f32.mrf.mxu0
  %369 = vdwg.mxu0
  %v371 = vunpack.c.l.b16 %v192
  %v372 = vpack.c.b16 %v371, %v371
  %373 = vrot.lane.b32.xlu0 %v372, 96
  %v374 = vpop.permute.xlu0 %373
  %v376 = vsel %vm206, %v184, 0
  %v379 = vsel %vm206, %v374, 0
  %381 = vmatpush.bf16.xpose.msra.mxu0 0
  %382 = vmatpush.bf16.xpose.msra.mxu0 0
  %383 = vmatpush.bf16.xpose.msra.mxu0 0
  %384 = vmatpush.bf16.xpose.msra.mxu0 0
  %385 = vmatpush.bf16.xpose.msra.mxu0 0
  %386 = vmatpush.bf16.xpose.msra.mxu0 0
  %387 = vmatpush.bf16.xpose.msra.mxu0 0
  %388 = vmatpush.bf16.xpose.msra.mxu0 %v379
  %389 = vmatmul.bf16.gmra.mxu0 %v376
  %v390 = vpop.f32.mrf.mxu0
  %v391 = vadd.f32 0.0, %v390
  %v392 = vpop.f32.mrf.mxu0
  %393 = vdwg.mxu0
  %vm394 = vcmask 64512
  %v395 = vsel %vm394, %v223, -inf
  %v396 = vrot.slane %v395, 4
  %v397 = vmax.f32 %v395, %v396
  %v398 = vrot.slane %v397, 2
  %v399 = vmax.f32 %v397, %v398
  %v400 = vrot.slane %v399, 1
  %v401 = vmax.f32 %v399, %v400
  %v402 = vsel %vm394, %v247, -inf
  %v403 = vrot.slane %v402, 4
  %v404 = vmax.f32 %v402, %v403
  %v405 = vrot.slane %v404, 2
  %v406 = vmax.f32 %v404, %v405
  %v407 = vrot.slane %v406, 1
  %v408 = vmax.f32 %v406, %v407
  %v409 = vsel %vm394, %v271, -inf
  %v410 = vrot.slane %v409, 4
  %v411 = vmax.f32 %v409, %v410
  %v412 = vrot.slane %v411, 2
  %v413 = vmax.f32 %v411, %v412
  %v414 = vrot.slane %v413, 1
  %v415 = vmax.f32 %v413, %v414
  %v416 = vsel %vm394, %v295, -inf
  %v417 = vrot.slane %v416, 4
  %v418 = vmax.f32 %v416, %v417
  %v419 = vrot.slane %v418, 2
  %v420 = vmax.f32 %v418, %v419
  %v421 = vrot.slane %v420, 1
  %v422 = vmax.f32 %v420, %v421
  %v423 = vsel %vm394, %v319, -inf
  %v424 = vrot.slane %v423, 4
  %v425 = vmax.f32 %v423, %v424
  %v426 = vrot.slane %v425, 2
  %v427 = vmax.f32 %v425, %v426
  %v428 = vrot.slane %v427, 1
  %v429 = vmax.f32 %v427, %v428
  %v430 = vsel %vm394, %v343, -inf
  %v431 = vrot.slane %v430, 4
  %v432 = vmax.f32 %v430, %v431
  %v433 = vrot.slane %v432, 2
  %v434 = vmax.f32 %v432, %v433
  %v435 = vrot.slane %v434, 1
  %v436 = vmax.f32 %v434, %v435
  %v437 = vsel %vm394, %v367, -inf
  %v438 = vrot.slane %v437, 4
  %v439 = vmax.f32 %v437, %v438
  %v440 = vrot.slane %v439, 2
  %v441 = vmax.f32 %v439, %v440
  %v442 = vrot.slane %v441, 1
  %v443 = vmax.f32 %v441, %v442
  %v444 = vsel %vm394, %v391, -inf
  %v445 = vrot.slane %v444, 4
  %v446 = vmax.f32 %v444, %v445
  %v447 = vrot.slane %v446, 2
  %v448 = vmax.f32 %v446, %v447
  %v449 = vrot.slane %v448, 1
  %v450 = vmax.f32 %v448, %v449
  %v451 = vsub.f32 %v223, %v401
  %v452 = vsub.f32 %v247, %v408
  %v453 = vsub.f32 %v271, %v415
  %v454 = vsub.f32 %v295, %v422
  %v455 = vsub.f32 %v319, %v429
  %v456 = vsub.f32 %v343, %v436
  %v457 = vsub.f32 %v367, %v443
  %v458 = vsub.f32 %v391, %v450
  %v459 = vmul.f32 %v451, 1.442695
  %v460 = vpow.pop %v459
  %v461 = vmul.f32 %v452, 1.442695
  %v462 = vpow.pop %v461
  %v463 = vmul.f32 %v453, 1.442695
  %v464 = vpow.pop %v463
  %v465 = vmul.f32 %v454, 1.442695
  %v466 = vpow.pop %v465
  %v467 = vmul.f32 %v455, 1.442695
  %v468 = vpow.pop %v467
  %v469 = vmul.f32 %v456, 1.442695
  %v470 = vpow.pop %v469
  %v471 = vmul.f32 %v457, 1.442695
  %v472 = vpow.pop %v471
  %v473 = vmul.f32 %v458, 1.442695
  %v474 = vpow.pop %v473
  %v475 = vsel %vm394, %v460, 0.0
  %v476 = vrot.slane %v475, 4
  %v477 = vadd.f32 %v475, %v476
  %v478 = vrot.slane %v477, 2
  %v479 = vadd.f32 %v477, %v478
  %v480 = vrot.slane %v479, 1
  %v481 = vadd.f32 %v479, %v480
  %v482 = vsel %vm394, %v462, 0.0
  %v483 = vrot.slane %v482, 4
  %v484 = vadd.f32 %v482, %v483
  %v485 = vrot.slane %v484, 2
  %v486 = vadd.f32 %v484, %v485
  %v487 = vrot.slane %v486, 1
  %v488 = vadd.f32 %v486, %v487
  %v489 = vsel %vm394, %v464, 0.0
  %v490 = vrot.slane %v489, 4
  %v491 = vadd.f32 %v489, %v490
  %v492 = vrot.slane %v491, 2
  %v493 = vadd.f32 %v491, %v492
  %v494 = vrot.slane %v493, 1
  %v495 = vadd.f32 %v493, %v494
  %v496 = vsel %vm394, %v466, 0.0
  %v497 = vrot.slane %v496, 4
  %v498 = vadd.f32 %v496, %v497
  %v499 = vrot.slane %v498, 2
  %v500 = vadd.f32 %v498, %v499
  %v501 = vrot.slane %v500, 1
  %v502 = vadd.f32 %v500, %v501
  %v503 = vsel %vm394, %v468, 0.0
  %v504 = vrot.slane %v503, 4
  %v505 = vadd.f32 %v503, %v504
  %v506 = vrot.slane %v505, 2
  %v507 = vadd.f32 %v505, %v506
  %v508 = vrot.slane %v507, 1
  %v509 = vadd.f32 %v507, %v508
  %v510 = vsel %vm394, %v470, 0.0
  %v511 = vrot.slane %v510, 4
  %v512 = vadd.f32 %v510, %v511
  %v513 = vrot.slane %v512, 2
  %v514 = vadd.f32 %v512, %v513
  %v515 = vrot.slane %v514, 1
  %v516 = vadd.f32 %v514, %v515
  %v517 = vsel %vm394, %v472, 0.0
  %v518 = vrot.slane %v517, 4
  %v519 = vadd.f32 %v517, %v518
  %v520 = vrot.slane %v519, 2
  %v521 = vadd.f32 %v519, %v520
  %v522 = vrot.slane %v521, 1
  %v523 = vadd.f32 %v521, %v522
  %v524 = vsel %vm394, %v474, 0.0
  %v525 = vrot.slane %v524, 4
  %v526 = vadd.f32 %v524, %v525
  %v527 = vrot.slane %v526, 2
  %v528 = vadd.f32 %v526, %v527
  %v529 = vrot.slane %v528, 1
  %v530 = vadd.f32 %v528, %v529
  %v531 = vrcp.pop %v481
  %v532 = vmul.f32 %v481, %v531
  %v533 = vsub.f32 1.0, %v532
  %v534 = vmul.f32 %v531, %v533
  %v535 = vadd.f32 %v531, %v534
  %vm536 = vweird.f32 %v481
  %vm537 = vweird.f32 %v531
  %vm538 = vmor %vm536, %vm537
  %v539 = vsel %vm538, %v531, %v535
  %v540 = vand.u32 2147483647, %v481
  %vm541 = vcmp.eq.f32.partialorder %v540, 8.507059e+37
  %v542 = vand.u32 %v481, 2147483648
  %v543 = vor.u32 1.1754944e-38, %v542
  %v544 = vsel %vm541, %v543, %v539
  %v545 = vmul.f32 %v460, %v544
  %v546 = vrcp.pop %v488
  %v547 = vmul.f32 %v488, %v546
  %v548 = vsub.f32 1.0, %v547
  %v549 = vmul.f32 %v546, %v548
  %v550 = vadd.f32 %v546, %v549
  %vm551 = vweird.f32 %v488
  %vm552 = vweird.f32 %v546
  %vm553 = vmor %vm551, %vm552
  %v554 = vsel %vm553, %v546, %v550
  %v555 = vand.u32 2147483647, %v488
  %vm556 = vcmp.eq.f32.partialorder %v555, 8.507059e+37
  %v557 = vand.u32 %v488, 2147483648
  %v558 = vor.u32 1.1754944e-38, %v557
  %v559 = vsel %vm556, %v558, %v554
  %v560 = vmul.f32 %v462, %v559
  %v561 = vrcp.pop %v495
  %v562 = vmul.f32 %v495, %v561
  %v563 = vsub.f32 1.0, %v562
  %v564 = vmul.f32 %v561, %v563
  %v565 = vadd.f32 %v561, %v564
  %vm566 = vweird.f32 %v495
  %vm567 = vweird.f32 %v561
  %vm568 = vmor %vm566, %vm567
  %v569 = vsel %vm568, %v561, %v565
  %v570 = vand.u32 2147483647, %v495
  %vm571 = vcmp.eq.f32.partialorder %v570, 8.507059e+37
  %v572 = vand.u32 %v495, 2147483648
  %v573 = vor.u32 1.1754944e-38, %v572
  %v574 = vsel %vm571, %v573, %v569
  %v575 = vmul.f32 %v464, %v574
  %v576 = vrcp.pop %v502
  %v577 = vmul.f32 %v502, %v576
  %v578 = vsub.f32 1.0, %v577
  %v579 = vmul.f32 %v576, %v578
  %v580 = vadd.f32 %v576, %v579
  %vm581 = vweird.f32 %v502
  %vm582 = vweird.f32 %v576
  %vm583 = vmor %vm581, %vm582
  %v584 = vsel %vm583, %v576, %v580
  %v585 = vand.u32 2147483647, %v502
  %vm586 = vcmp.eq.f32.partialorder %v585, 8.507059e+37
  %v587 = vand.u32 %v502, 2147483648
  %v588 = vor.u32 1.1754944e-38, %v587
  %v589 = vsel %vm586, %v588, %v584
  %v590 = vmul.f32 %v466, %v589
  %v591 = vrcp.pop %v509
  %v592 = vmul.f32 %v509, %v591
  %v593 = vsub.f32 1.0, %v592
  %v594 = vmul.f32 %v591, %v593
  %v595 = vadd.f32 %v591, %v594
  %vm596 = vweird.f32 %v509
  %vm597 = vweird.f32 %v591
  %vm598 = vmor %vm596, %vm597
  %v599 = vsel %vm598, %v591, %v595
  %v600 = vand.u32 2147483647, %v509
  %vm601 = vcmp.eq.f32.partialorder %v600, 8.507059e+37
  %v602 = vand.u32 %v509, 2147483648
  %v603 = vor.u32 1.1754944e-38, %v602
  %v604 = vsel %vm601, %v603, %v599
  %v605 = vmul.f32 %v468, %v604
  %v606 = vrcp.pop %v516
  %v607 = vmul.f32 %v516, %v606
  %v608 = vsub.f32 1.0, %v607
  %v609 = vmul.f32 %v606, %v608
  %v610 = vadd.f32 %v606, %v609
  %vm611 = vweird.f32 %v516
  %vm612 = vweird.f32 %v606
  %vm613 = vmor %vm611, %vm612
  %v614 = vsel %vm613, %v606, %v610
  %v615 = vand.u32 2147483647, %v516
  %vm616 = vcmp.eq.f32.partialorder %v615, 8.507059e+37
  %v617 = vand.u32 %v516, 2147483648
  %v618 = vor.u32 1.1754944e-38, %v617
  %v619 = vsel %vm616, %v618, %v614
  %v620 = vmul.f32 %v470, %v619
  %v621 = vrcp.pop %v523
  %v622 = vmul.f32 %v523, %v621
  %v623 = vsub.f32 1.0, %v622
  %v624 = vmul.f32 %v621, %v623
  %v625 = vadd.f32 %v621, %v624
  %vm626 = vweird.f32 %v523
  %vm627 = vweird.f32 %v621
  %vm628 = vmor %vm626, %vm627
  %v629 = vsel %vm628, %v621, %v625
  %v630 = vand.u32 2147483647, %v523
  %vm631 = vcmp.eq.f32.partialorder %v630, 8.507059e+37
  %v632 = vand.u32 %v523, 2147483648
  %v633 = vor.u32 1.1754944e-38, %v632
  %v634 = vsel %vm631, %v633, %v629
  %v635 = vmul.f32 %v472, %v634
  %v636 = vrcp.pop %v530
  %v637 = vmul.f32 %v530, %v636
  %v638 = vsub.f32 1.0, %v637
  %v639 = vmul.f32 %v636, %v638
  %v640 = vadd.f32 %v636, %v639
  %vm641 = vweird.f32 %v530
  %vm642 = vweird.f32 %v636
  %vm643 = vmor %vm641, %vm642
  %v644 = vsel %vm643, %v636, %v640
  %v645 = vand.u32 2147483647, %v530
  %vm646 = vcmp.eq.f32.partialorder %v645, 8.507059e+37
  %v647 = vand.u32 %v530, 2147483648
  %v648 = vor.u32 1.1754944e-38, %v647
  %v649 = vsel %vm646, %v648, %v644
  %v650 = vmul.f32 %v474, %v649
  %v651 = vpack.c.bf16 %v545, %v545
  %v652 = vpack.c.bf16 %v560, %v560
  %v653 = vpack.c.bf16 %v575, %v575
  %v654 = vpack.c.bf16 %v590, %v590
  %v655 = vpack.c.bf16 %v605, %v605
  %v656 = vpack.c.bf16 %v620, %v620
  %v657 = vpack.c.bf16 %v635, %v635
  %v658 = vpack.c.bf16 %v650, %v650
  %v660 = vunpack.c.l.b16 %v193
  %v661 = vpack.c.b16 %v660, %v660
  %662 = vrot.lane.b32.xlu0 %v661, 64
  %v663 = vpop.permute.xlu0 %662
  %v665 = vsel %vm394, %v651, 0
  %vm667 = vcmask 1043456
  %v669 = vsel %vm667, %v663, 0
  %671 = vmatpush.bf16.msra.mxu0 0
  %672 = vmatpush.bf16.msra.mxu0 0
  %673 = vmatpush.bf16.msra.mxu0 0
  %674 = vmatpush.bf16.msra.mxu0 0
  %675 = vmatpush.bf16.msra.mxu0 0
  %676 = vmatpush.bf16.msra.mxu0 0
  %677 = vmatpush.bf16.msra.mxu0 0
  %678 = vmatpush.bf16.msra.mxu0 %v669
  %679 = vmatmul.bf16.gmra.mxu0 %v665
  %v680 = vpop.f32.mrf.mxu0
  %v681 = vadd.f32 0.0, %v680
  %v682 = vpop.f32.mrf.mxu0
  %683 = vdwg.mxu0
  %v685 = vunpack.c.l.b16 %v194
  %v686 = vpack.c.b16 %v685, %v685
  %687 = vrot.lane.b32.xlu0 %v686, 64
  %v688 = vpop.permute.xlu0 %687
  %v690 = vsel %vm394, %v652, 0
  %v693 = vsel %vm667, %v688, 0
  %695 = vmatpush.bf16.msra.mxu0 0
  %696 = vmatpush.bf16.msra.mxu0 0
  %697 = vmatpush.bf16.msra.mxu0 0
  %698 = vmatpush.bf16.msra.mxu0 0
  %699 = vmatpush.bf16.msra.mxu0 0
  %700 = vmatpush.bf16.msra.mxu0 0
  %701 = vmatpush.bf16.msra.mxu0 0
  %702 = vmatpush.bf16.msra.mxu0 %v693
  %703 = vmatmul.bf16.gmra.mxu0 %v690
  %v704 = vpop.f32.mrf.mxu0
  %v705 = vadd.f32 0.0, %v704
  %v706 = vpop.f32.mrf.mxu0
  %707 = vdwg.mxu0
  %v709 = vunpack.c.l.b16 %v195
  %v710 = vpack.c.b16 %v709, %v709
  %711 = vrot.lane.b32.xlu0 %v710, 64
  %v712 = vpop.permute.xlu0 %711
  %v714 = vsel %vm394, %v653, 0
  %v717 = vsel %vm667, %v712, 0
  %719 = vmatpush.bf16.msra.mxu0 0
  %720 = vmatpush.bf16.msra.mxu0 0
  %721 = vmatpush.bf16.msra.mxu0 0
  %722 = vmatpush.bf16.msra.mxu0 0
  %723 = vmatpush.bf16.msra.mxu0 0
  %724 = vmatpush.bf16.msra.mxu0 0
  %725 = vmatpush.bf16.msra.mxu0 0
  %726 = vmatpush.bf16.msra.mxu0 %v717
  %727 = vmatmul.bf16.gmra.mxu0 %v714
  %v728 = vpop.f32.mrf.mxu0
  %v729 = vadd.f32 0.0, %v728
  %v730 = vpop.f32.mrf.mxu0
  %731 = vdwg.mxu0
  %v733 = vunpack.c.l.b16 %v196
  %v734 = vpack.c.b16 %v733, %v733
  %735 = vrot.lane.b32.xlu0 %v734, 64
  %v736 = vpop.permute.xlu0 %735
  %v738 = vsel %vm394, %v654, 0
  %v741 = vsel %vm667, %v736, 0
  %743 = vmatpush.bf16.msra.mxu0 0
  %744 = vmatpush.bf16.msra.mxu0 0
  %745 = vmatpush.bf16.msra.mxu0 0
  %746 = vmatpush.bf16.msra.mxu0 0
  %747 = vmatpush.bf16.msra.mxu0 0
  %748 = vmatpush.bf16.msra.mxu0 0
  %749 = vmatpush.bf16.msra.mxu0 0
  %750 = vmatpush.bf16.msra.mxu0 %v741
  %751 = vmatmul.bf16.gmra.mxu0 %v738
  %v752 = vpop.f32.mrf.mxu0
  %v753 = vadd.f32 0.0, %v752
  %v754 = vpop.f32.mrf.mxu0
  %755 = vdwg.mxu0
  %v757 = vunpack.c.l.b16 %v197
  %v758 = vpack.c.b16 %v757, %v757
  %759 = vrot.lane.b32.xlu0 %v758, 64
  %v760 = vpop.permute.xlu0 %759
  %v762 = vsel %vm394, %v655, 0
  %v765 = vsel %vm667, %v760, 0
  %767 = vmatpush.bf16.msra.mxu0 0
  %768 = vmatpush.bf16.msra.mxu0 0
  %769 = vmatpush.bf16.msra.mxu0 0
  %770 = vmatpush.bf16.msra.mxu0 0
  %771 = vmatpush.bf16.msra.mxu0 0
  %772 = vmatpush.bf16.msra.mxu0 0
  %773 = vmatpush.bf16.msra.mxu0 0
  %774 = vmatpush.bf16.msra.mxu0 %v765
  %775 = vmatmul.bf16.gmra.mxu0 %v762
  %v776 = vpop.f32.mrf.mxu0
  %v777 = vadd.f32 0.0, %v776
  %v778 = vpop.f32.mrf.mxu0
  %779 = vdwg.mxu0
  %v781 = vunpack.c.l.b16 %v198
  %v782 = vpack.c.b16 %v781, %v781
  %783 = vrot.lane.b32.xlu0 %v782, 64
  %v784 = vpop.permute.xlu0 %783
  %v786 = vsel %vm394, %v656, 0
  %v789 = vsel %vm667, %v784, 0
  %791 = vmatpush.bf16.msra.mxu0 0
  %792 = vmatpush.bf16.msra.mxu0 0
  %793 = vmatpush.bf16.msra.mxu0 0
  %794 = vmatpush.bf16.msra.mxu0 0
  %795 = vmatpush.bf16.msra.mxu0 0
  %796 = vmatpush.bf16.msra.mxu0 0
  %797 = vmatpush.bf16.msra.mxu0 0
  %798 = vmatpush.bf16.msra.mxu0 %v789
  %799 = vmatmul.bf16.gmra.mxu0 %v786
  %v800 = vpop.f32.mrf.mxu0
  %v801 = vadd.f32 0.0, %v800
  %v802 = vpop.f32.mrf.mxu0
  %803 = vdwg.mxu0
  %v805 = vunpack.c.l.b16 %v199
  %v806 = vpack.c.b16 %v805, %v805
  %807 = vrot.lane.b32.xlu0 %v806, 64
  %v808 = vpop.permute.xlu0 %807
  %v810 = vsel %vm394, %v657, 0
  %v813 = vsel %vm667, %v808, 0
  %815 = vmatpush.bf16.msra.mxu0 0
  %816 = vmatpush.bf16.msra.mxu0 0
  %817 = vmatpush.bf16.msra.mxu0 0
  %818 = vmatpush.bf16.msra.mxu0 0
  %819 = vmatpush.bf16.msra.mxu0 0
  %820 = vmatpush.bf16.msra.mxu0 0
  %821 = vmatpush.bf16.msra.mxu0 0
  %822 = vmatpush.bf16.msra.mxu0 %v813
  %823 = vmatmul.bf16.gmra.mxu0 %v810
  %v824 = vpop.f32.mrf.mxu0
  %v825 = vadd.f32 0.0, %v824
  %v826 = vpop.f32.mrf.mxu0
  %827 = vdwg.mxu0
  %v829 = vunpack.c.l.b16 %v200
  %v830 = vpack.c.b16 %v829, %v829
  %831 = vrot.lane.b32.xlu0 %v830, 64
  %v832 = vpop.permute.xlu0 %831
  %v834 = vsel %vm394, %v658, 0
  %v837 = vsel %vm667, %v832, 0
  %839 = vmatpush.bf16.msra.mxu0 0
  %840 = vmatpush.bf16.msra.mxu0 0
  %841 = vmatpush.bf16.msra.mxu0 0
  %842 = vmatpush.bf16.msra.mxu0 0
  %843 = vmatpush.bf16.msra.mxu0 0
  %844 = vmatpush.bf16.msra.mxu0 0
  %845 = vmatpush.bf16.msra.mxu0 0
  %846 = vmatpush.bf16.msra.mxu0 %v837
  %847 = vmatmul.bf16.gmra.mxu0 %v834
  %v848 = vpop.f32.mrf.mxu0
  %v849 = vadd.f32 0.0, %v848
  %v850 = vpop.f32.mrf.mxu0
  %851 = vdwg.mxu0
  %v853 = vunpack.c.l.b16 %v177
  %v854 = vpack.c.b16 %v853, %v853
  %855 = vrot.lane.b32.xlu0 %v854, 112
  %v856 = vpop.permute.xlu0 %855
  %857 = vrot.lane.b32.xlu0 %v203, 80
  %v858 = vpop.permute.xlu0 %857
  %v860 = vsel %vm206, %v856, 0
  %v863 = vsel %vm206, %v858, 0
  %865 = vmatpush.bf16.xpose.msra.mxu0 0
  %866 = vmatpush.bf16.xpose.msra.mxu0 0
  %867 = vmatpush.bf16.xpose.msra.mxu0 0
  %868 = vmatpush.bf16.xpose.msra.mxu0 0
  %869 = vmatpush.bf16.xpose.msra.mxu0 0
  %870 = vmatpush.bf16.xpose.msra.mxu0 0
  %871 = vmatpush.bf16.xpose.msra.mxu0 0
  %872 = vmatpush.bf16.xpose.msra.mxu0 %v863
  %873 = vmatmul.bf16.gmra.mxu0 %v860
  %v874 = vpop.f32.mrf.mxu0
  %v875 = vadd.f32 0.0, %v874
  %v876 = vpop.f32.mrf.mxu0
  %877 = vdwg.mxu0
  %v879 = vunpack.c.l.b16 %v178
  %v880 = vpack.c.b16 %v879, %v879
  %881 = vrot.lane.b32.xlu0 %v880, 112
  %v882 = vpop.permute.xlu0 %881
  %883 = vrot.lane.b32.xlu0 %v228, 80
  %v884 = vpop.permute.xlu0 %883
  %v886 = vsel %vm206, %v882, 0
  %v889 = vsel %vm206, %v884, 0
  %891 = vmatpush.bf16.xpose.msra.mxu0 0
  %892 = vmatpush.bf16.xpose.msra.mxu0 0
  %893 = vmatpush.bf16.xpose.msra.mxu0 0
  %894 = vmatpush.bf16.xpose.msra.mxu0 0
  %895 = vmatpush.bf16.xpose.msra.mxu0 0
  %896 = vmatpush.bf16.xpose.msra.mxu0 0
  %897 = vmatpush.bf16.xpose.msra.mxu0 0
  %898 = vmatpush.bf16.xpose.msra.mxu0 %v889
  %899 = vmatmul.bf16.gmra.mxu0 %v886
  %v900 = vpop.f32.mrf.mxu0
  %v901 = vadd.f32 0.0, %v900
  %v902 = vpop.f32.mrf.mxu0
  %903 = vdwg.mxu0
  %v905 = vunpack.c.l.b16 %v179
  %v906 = vpack.c.b16 %v905, %v905
  %907 = vrot.lane.b32.xlu0 %v906, 112
  %v908 = vpop.permute.xlu0 %907
  %909 = vrot.lane.b32.xlu0 %v252, 80
  %v910 = vpop.permute.xlu0 %909
  %v912 = vsel %vm206, %v908, 0
  %v915 = vsel %vm206, %v910, 0
  %917 = vmatpush.bf16.xpose.msra.mxu0 0
  %918 = vmatpush.bf16.xpose.msra.mxu0 0
  %919 = vmatpush.bf16.xpose.msra.mxu0 0
  %920 = vmatpush.bf16.xpose.msra.mxu0 0
  %921 = vmatpush.bf16.xpose.msra.mxu0 0
  %922 = vmatpush.bf16.xpose.msra.mxu0 0
  %923 = vmatpush.bf16.xpose.msra.mxu0 0
  %924 = vmatpush.bf16.xpose.msra.mxu0 %v915
  %925 = vmatmul.bf16.gmra.mxu0 %v912
  %v926 = vpop.f32.mrf.mxu0
  %v927 = vadd.f32 0.0, %v926
  %v928 = vpop.f32.mrf.mxu0
  %929 = vdwg.mxu0
  %v931 = vunpack.c.l.b16 %v180
  %v932 = vpack.c.b16 %v931, %v931
  %933 = vrot.lane.b32.xlu0 %v932, 112
  %v934 = vpop.permute.xlu0 %933
  %935 = vrot.lane.b32.xlu0 %v276, 80
  %v936 = vpop.permute.xlu0 %935
  %v938 = vsel %vm206, %v934, 0
  %v941 = vsel %vm206, %v936, 0
  %943 = vmatpush.bf16.xpose.msra.mxu0 0
  %944 = vmatpush.bf16.xpose.msra.mxu0 0
  %945 = vmatpush.bf16.xpose.msra.mxu0 0
  %946 = vmatpush.bf16.xpose.msra.mxu0 0
  %947 = vmatpush.bf16.xpose.msra.mxu0 0
  %948 = vmatpush.bf16.xpose.msra.mxu0 0
  %949 = vmatpush.bf16.xpose.msra.mxu0 0
  %950 = vmatpush.bf16.xpose.msra.mxu0 %v941
  %951 = vmatmul.bf16.gmra.mxu0 %v938
  %v952 = vpop.f32.mrf.mxu0
  %v953 = vadd.f32 0.0, %v952
  %v954 = vpop.f32.mrf.mxu0
  %955 = vdwg.mxu0
  %v957 = vunpack.c.l.b16 %v181
  %v958 = vpack.c.b16 %v957, %v957
  %959 = vrot.lane.b32.xlu0 %v958, 112
  %v960 = vpop.permute.xlu0 %959
  %961 = vrot.lane.b32.xlu0 %v300, 80
  %v962 = vpop.permute.xlu0 %961
  %v964 = vsel %vm206, %v960, 0
  %v967 = vsel %vm206, %v962, 0
  %969 = vmatpush.bf16.xpose.msra.mxu0 0
  %970 = vmatpush.bf16.xpose.msra.mxu0 0
  %971 = vmatpush.bf16.xpose.msra.mxu0 0
  %972 = vmatpush.bf16.xpose.msra.mxu0 0
  %973 = vmatpush.bf16.xpose.msra.mxu0 0
  %974 = vmatpush.bf16.xpose.msra.mxu0 0
  %975 = vmatpush.bf16.xpose.msra.mxu0 0
  %976 = vmatpush.bf16.xpose.msra.mxu0 %v967
  %977 = vmatmul.bf16.gmra.mxu0 %v964
  %v978 = vpop.f32.mrf.mxu0
  %v979 = vadd.f32 0.0, %v978
  %v980 = vpop.f32.mrf.mxu0
  %981 = vdwg.mxu0
  %v983 = vunpack.c.l.b16 %v182
  %v984 = vpack.c.b16 %v983, %v983
  %985 = vrot.lane.b32.xlu0 %v984, 112
  %v986 = vpop.permute.xlu0 %985
  %987 = vrot.lane.b32.xlu0 %v324, 80
  %v988 = vpop.permute.xlu0 %987
  %v990 = vsel %vm206, %v986, 0
  %v993 = vsel %vm206, %v988, 0
  %995 = vmatpush.bf16.xpose.msra.mxu0 0
  %996 = vmatpush.bf16.xpose.msra.mxu0 0
  %997 = vmatpush.bf16.xpose.msra.mxu0 0
  %998 = vmatpush.bf16.xpose.msra.mxu0 0
  %999 = vmatpush.bf16.xpose.msra.mxu0 0
  %1000 = vmatpush.bf16.xpose.msra.mxu0 0
  %1001 = vmatpush.bf16.xpose.msra.mxu0 0
  %1002 = vmatpush.bf16.xpose.msra.mxu0 %v993
  %1003 = vmatmul.bf16.gmra.mxu0 %v990
  %v1004 = vpop.f32.mrf.mxu0
  %v1005 = vadd.f32 0.0, %v1004
  %v1006 = vpop.f32.mrf.mxu0
  %1007 = vdwg.mxu0
  %v1009 = vunpack.c.l.b16 %v183
  %v1010 = vpack.c.b16 %v1009, %v1009
  %1011 = vrot.lane.b32.xlu0 %v1010, 112
  %v1012 = vpop.permute.xlu0 %1011
  %1013 = vrot.lane.b32.xlu0 %v348, 80
  %v1014 = vpop.permute.xlu0 %1013
  %v1016 = vsel %vm206, %v1012, 0
  %v1019 = vsel %vm206, %v1014, 0
  %1021 = vmatpush.bf16.xpose.msra.mxu0 0
  %1022 = vmatpush.bf16.xpose.msra.mxu0 0
  %1023 = vmatpush.bf16.xpose.msra.mxu0 0
  %1024 = vmatpush.bf16.xpose.msra.mxu0 0
  %1025 = vmatpush.bf16.xpose.msra.mxu0 0
  %1026 = vmatpush.bf16.xpose.msra.mxu0 0
  %1027 = vmatpush.bf16.xpose.msra.mxu0 0
  %1028 = vmatpush.bf16.xpose.msra.mxu0 %v1019
  %1029 = vmatmul.bf16.gmra.mxu0 %v1016
  %v1030 = vpop.f32.mrf.mxu0
  %v1031 = vadd.f32 0.0, %v1030
  %v1032 = vpop.f32.mrf.mxu0
  %1033 = vdwg.mxu0
  %v1035 = vunpack.c.l.b16 %v184
  %v1036 = vpack.c.b16 %v1035, %v1035
  %1037 = vrot.lane.b32.xlu0 %v1036, 112
  %v1038 = vpop.permute.xlu0 %1037
  %1039 = vrot.lane.b32.xlu0 %v372, 80
  %v1040 = vpop.permute.xlu0 %1039
  %v1042 = vsel %vm206, %v1038, 0
  %v1045 = vsel %vm206, %v1040, 0
  %1047 = vmatpush.bf16.xpose.msra.mxu0 0
  %1048 = vmatpush.bf16.xpose.msra.mxu0 0
  %1049 = vmatpush.bf16.xpose.msra.mxu0 0
  %1050 = vmatpush.bf16.xpose.msra.mxu0 0
  %1051 = vmatpush.bf16.xpose.msra.mxu0 0
  %1052 = vmatpush.bf16.xpose.msra.mxu0 0
  %1053 = vmatpush.bf16.xpose.msra.mxu0 0
  %1054 = vmatpush.bf16.xpose.msra.mxu0 %v1045
  %1055 = vmatmul.bf16.gmra.mxu0 %v1042
  %v1056 = vpop.f32.mrf.mxu0
  %v1057 = vadd.f32 0.0, %v1056
  %v1058 = vpop.f32.mrf.mxu0
  %1059 = vdwg.mxu0
  %v1060 = vsel %vm394, %v875, -inf
  %v1061 = vrot.slane %v1060, 4
  %v1062 = vmax.f32 %v1060, %v1061
  %v1063 = vrot.slane %v1062, 2
  %v1064 = vmax.f32 %v1062, %v1063
  %v1065 = vrot.slane %v1064, 1
  %v1066 = vmax.f32 %v1064, %v1065
  %v1067 = vsel %vm394, %v901, -inf
  %v1068 = vrot.slane %v1067, 4
  %v1069 = vmax.f32 %v1067, %v1068
  %v1070 = vrot.slane %v1069, 2
  %v1071 = vmax.f32 %v1069, %v1070
  %v1072 = vrot.slane %v1071, 1
  %v1073 = vmax.f32 %v1071, %v1072
  %v1074 = vsel %vm394, %v927, -inf
  %v1075 = vrot.slane %v1074, 4
  %v1076 = vmax.f32 %v1074, %v1075
  %v1077 = vrot.slane %v1076, 2
  %v1078 = vmax.f32 %v1076, %v1077
  %v1079 = vrot.slane %v1078, 1
  %v1080 = vmax.f32 %v1078, %v1079
  %v1081 = vsel %vm394, %v953, -inf
  %v1082 = vrot.slane %v1081, 4
  %v1083 = vmax.f32 %v1081, %v1082
  %v1084 = vrot.slane %v1083, 2
  %v1085 = vmax.f32 %v1083, %v1084
  %v1086 = vrot.slane %v1085, 1
  %v1087 = vmax.f32 %v1085, %v1086
  %v1088 = vsel %vm394, %v979, -inf
  %v1089 = vrot.slane %v1088, 4
  %v1090 = vmax.f32 %v1088, %v1089
  %v1091 = vrot.slane %v1090, 2
  %v1092 = vmax.f32 %v1090, %v1091
  %v1093 = vrot.slane %v1092, 1
  %v1094 = vmax.f32 %v1092, %v1093
  %v1095 = vsel %vm394, %v1005, -inf
  %v1096 = vrot.slane %v1095, 4
  %v1097 = vmax.f32 %v1095, %v1096
  %v1098 = vrot.slane %v1097, 2
  %v1099 = vmax.f32 %v1097, %v1098
  %v1100 = vrot.slane %v1099, 1
  %v1101 = vmax.f32 %v1099, %v1100
  %v1102 = vsel %vm394, %v1031, -inf
  %v1103 = vrot.slane %v1102, 4
  %v1104 = vmax.f32 %v1102, %v1103
  %v1105 = vrot.slane %v1104, 2
  %v1106 = vmax.f32 %v1104, %v1105
  %v1107 = vrot.slane %v1106, 1
  %v1108 = vmax.f32 %v1106, %v1107
  %v1109 = vsel %vm394, %v1057, -inf
  %v1110 = vrot.slane %v1109, 4
  %v1111 = vmax.f32 %v1109, %v1110
  %v1112 = vrot.slane %v1111, 2
  %v1113 = vmax.f32 %v1111, %v1112
  %v1114 = vrot.slane %v1113, 1
  %v1115 = vmax.f32 %v1113, %v1114
  %v1116 = vsub.f32 %v875, %v1066
  %v1117 = vsub.f32 %v901, %v1073
  %v1118 = vsub.f32 %v927, %v1080
  %v1119 = vsub.f32 %v953, %v1087
  %v1120 = vsub.f32 %v979, %v1094
  %v1121 = vsub.f32 %v1005, %v1101
  %v1122 = vsub.f32 %v1031, %v1108
  %v1123 = vsub.f32 %v1057, %v1115
  %v1124 = vmul.f32 %v1116, 1.442695
  %v1125 = vpow.pop %v1124
  %v1126 = vmul.f32 %v1117, 1.442695
  %v1127 = vpow.pop %v1126
  %v1128 = vmul.f32 %v1118, 1.442695
  %v1129 = vpow.pop %v1128
  %v1130 = vmul.f32 %v1119, 1.442695
  %v1131 = vpow.pop %v1130
  %v1132 = vmul.f32 %v1120, 1.442695
  %v1133 = vpow.pop %v1132
  %v1134 = vmul.f32 %v1121, 1.442695
  %v1135 = vpow.pop %v1134
  %v1136 = vmul.f32 %v1122, 1.442695
  %v1137 = vpow.pop %v1136
  %v1138 = vmul.f32 %v1123, 1.442695
  %v1139 = vpow.pop %v1138
  %v1140 = vsel %vm394, %v1125, 0.0
  %v1141 = vrot.slane %v1140, 4
  %v1142 = vadd.f32 %v1140, %v1141
  %v1143 = vrot.slane %v1142, 2
  %v1144 = vadd.f32 %v1142, %v1143
  %v1145 = vrot.slane %v1144, 1
  %v1146 = vadd.f32 %v1144, %v1145
  %v1147 = vsel %vm394, %v1127, 0.0
  %v1148 = vrot.slane %v1147, 4
  %v1149 = vadd.f32 %v1147, %v1148
  %v1150 = vrot.slane %v1149, 2
  %v1151 = vadd.f32 %v1149, %v1150
  %v1152 = vrot.slane %v1151, 1
  %v1153 = vadd.f32 %v1151, %v1152
  %v1154 = vsel %vm394, %v1129, 0.0
  %v1155 = vrot.slane %v1154, 4
  %v1156 = vadd.f32 %v1154, %v1155
  %v1157 = vrot.slane %v1156, 2
  %v1158 = vadd.f32 %v1156, %v1157
  %v1159 = vrot.slane %v1158, 1
  %v1160 = vadd.f32 %v1158, %v1159
  %v1161 = vsel %vm394, %v1131, 0.0
  %v1162 = vrot.slane %v1161, 4
  %v1163 = vadd.f32 %v1161, %v1162
  %v1164 = vrot.slane %v1163, 2
  %v1165 = vadd.f32 %v1163, %v1164
  %v1166 = vrot.slane %v1165, 1
  %v1167 = vadd.f32 %v1165, %v1166
  %v1168 = vsel %vm394, %v1133, 0.0
  %v1169 = vrot.slane %v1168, 4
  %v1170 = vadd.f32 %v1168, %v1169
  %v1171 = vrot.slane %v1170, 2
  %v1172 = vadd.f32 %v1170, %v1171
  %v1173 = vrot.slane %v1172, 1
  %v1174 = vadd.f32 %v1172, %v1173
  %v1175 = vsel %vm394, %v1135, 0.0
  %v1176 = vrot.slane %v1175, 4
  %v1177 = vadd.f32 %v1175, %v1176
  %v1178 = vrot.slane %v1177, 2
  %v1179 = vadd.f32 %v1177, %v1178
  %v1180 = vrot.slane %v1179, 1
  %v1181 = vadd.f32 %v1179, %v1180
  %v1182 = vsel %vm394, %v1137, 0.0
  %v1183 = vrot.slane %v1182, 4
  %v1184 = vadd.f32 %v1182, %v1183
  %v1185 = vrot.slane %v1184, 2
  %v1186 = vadd.f32 %v1184, %v1185
  %v1187 = vrot.slane %v1186, 1
  %v1188 = vadd.f32 %v1186, %v1187
  %v1189 = vsel %vm394, %v1139, 0.0
  %v1190 = vrot.slane %v1189, 4
  %v1191 = vadd.f32 %v1189, %v1190
  %v1192 = vrot.slane %v1191, 2
  %v1193 = vadd.f32 %v1191, %v1192
  %v1194 = vrot.slane %v1193, 1
  %v1195 = vadd.f32 %v1193, %v1194
  %v1196 = vrcp.pop %v1146
  %v1197 = vmul.f32 %v1146, %v1196
  %v1198 = vsub.f32 1.0, %v1197
  %v1199 = vmul.f32 %v1196, %v1198
  %v1200 = vadd.f32 %v1196, %v1199
  %vm1201 = vweird.f32 %v1146
  %vm1202 = vweird.f32 %v1196
  %vm1203 = vmor %vm1201, %vm1202
  %v1204 = vsel %vm1203, %v1196, %v1200
  %v1205 = vand.u32 2147483647, %v1146
  %vm1206 = vcmp.eq.f32.partialorder %v1205, 8.507059e+37
  %v1207 = vand.u32 %v1146, 2147483648
  %v1208 = vor.u32 1.1754944e-38, %v1207
  %v1209 = vsel %vm1206, %v1208, %v1204
  %v1210 = vmul.f32 %v1125, %v1209
  %v1211 = vrcp.pop %v1153
  %v1212 = vmul.f32 %v1153, %v1211
  %v1213 = vsub.f32 1.0, %v1212
  %v1214 = vmul.f32 %v1211, %v1213
  %v1215 = vadd.f32 %v1211, %v1214
  %vm1216 = vweird.f32 %v1153
  %vm1217 = vweird.f32 %v1211
  %vm1218 = vmor %vm1216, %vm1217
  %v1219 = vsel %vm1218, %v1211, %v1215
  %v1220 = vand.u32 2147483647, %v1153
  %vm1221 = vcmp.eq.f32.partialorder %v1220, 8.507059e+37
  %v1222 = vand.u32 %v1153, 2147483648
  %v1223 = vor.u32 1.1754944e-38, %v1222
  %v1224 = vsel %vm1221, %v1223, %v1219
  %v1225 = vmul.f32 %v1127, %v1224
  %v1226 = vrcp.pop %v1160
  %v1227 = vmul.f32 %v1160, %v1226
  %v1228 = vsub.f32 1.0, %v1227
  %v1229 = vmul.f32 %v1226, %v1228
  %v1230 = vadd.f32 %v1226, %v1229
  %vm1231 = vweird.f32 %v1160
  %vm1232 = vweird.f32 %v1226
  %vm1233 = vmor %vm1231, %vm1232
  %v1234 = vsel %vm1233, %v1226, %v1230
  %v1235 = vand.u32 2147483647, %v1160
  %vm1236 = vcmp.eq.f32.partialorder %v1235, 8.507059e+37
  %v1237 = vand.u32 %v1160, 2147483648
  %v1238 = vor.u32 1.1754944e-38, %v1237
  %v1239 = vsel %vm1236, %v1238, %v1234
  %v1240 = vmul.f32 %v1129, %v1239
  %v1241 = vrcp.pop %v1167
  %v1242 = vmul.f32 %v1167, %v1241
  %v1243 = vsub.f32 1.0, %v1242
  %v1244 = vmul.f32 %v1241, %v1243
  %v1245 = vadd.f32 %v1241, %v1244
  %vm1246 = vweird.f32 %v1167
  %vm1247 = vweird.f32 %v1241
  %vm1248 = vmor %vm1246, %vm1247
  %v1249 = vsel %vm1248, %v1241, %v1245
  %v1250 = vand.u32 2147483647, %v1167
  %vm1251 = vcmp.eq.f32.partialorder %v1250, 8.507059e+37
  %v1252 = vand.u32 %v1167, 2147483648
  %v1253 = vor.u32 1.1754944e-38, %v1252
  %v1254 = vsel %vm1251, %v1253, %v1249
  %v1255 = vmul.f32 %v1131, %v1254
  %v1256 = vrcp.pop %v1174
  %v1257 = vmul.f32 %v1174, %v1256
  %v1258 = vsub.f32 1.0, %v1257
  %v1259 = vmul.f32 %v1256, %v1258
  %v1260 = vadd.f32 %v1256, %v1259
  %vm1261 = vweird.f32 %v1174
  %vm1262 = vweird.f32 %v1256
  %vm1263 = vmor %vm1261, %vm1262
  %v1264 = vsel %vm1263, %v1256, %v1260
  %v1265 = vand.u32 2147483647, %v1174
  %vm1266 = vcmp.eq.f32.partialorder %v1265, 8.507059e+37
  %v1267 = vand.u32 %v1174, 2147483648
  %v1268 = vor.u32 1.1754944e-38, %v1267
  %v1269 = vsel %vm1266, %v1268, %v1264
  %v1270 = vmul.f32 %v1133, %v1269
  %v1271 = vrcp.pop %v1181
  %v1272 = vmul.f32 %v1181, %v1271
  %v1273 = vsub.f32 1.0, %v1272
  %v1274 = vmul.f32 %v1271, %v1273
  %v1275 = vadd.f32 %v1271, %v1274
  %vm1276 = vweird.f32 %v1181
  %vm1277 = vweird.f32 %v1271
  %vm1278 = vmor %vm1276, %vm1277
  %v1279 = vsel %vm1278, %v1271, %v1275
  %v1280 = vand.u32 2147483647, %v1181
  %vm1281 = vcmp.eq.f32.partialorder %v1280, 8.507059e+37
  %v1282 = vand.u32 %v1181, 2147483648
  %v1283 = vor.u32 1.1754944e-38, %v1282
  %v1284 = vsel %vm1281, %v1283, %v1279
  %v1285 = vmul.f32 %v1135, %v1284
  %v1286 = vrcp.pop %v1188
  %v1287 = vmul.f32 %v1188, %v1286
  %v1288 = vsub.f32 1.0, %v1287
  %v1289 = vmul.f32 %v1286, %v1288
  %v1290 = vadd.f32 %v1286, %v1289
  %vm1291 = vweird.f32 %v1188
  %vm1292 = vweird.f32 %v1286
  %vm1293 = vmor %vm1291, %vm1292
  %v1294 = vsel %vm1293, %v1286, %v1290
  %v1295 = vand.u32 2147483647, %v1188
  %vm1296 = vcmp.eq.f32.partialorder %v1295, 8.507059e+37
  %v1297 = vand.u32 %v1188, 2147483648
  %v1298 = vor.u32 1.1754944e-38, %v1297
  %v1299 = vsel %vm1296, %v1298, %v1294
  %v1300 = vmul.f32 %v1137, %v1299
  %v1301 = vrcp.pop %v1195
  %v1302 = vmul.f32 %v1195, %v1301
  %v1303 = vsub.f32 1.0, %v1302
  %v1304 = vmul.f32 %v1301, %v1303
  %v1305 = vadd.f32 %v1301, %v1304
  %vm1306 = vweird.f32 %v1195
  %vm1307 = vweird.f32 %v1301
  %vm1308 = vmor %vm1306, %vm1307
  %v1309 = vsel %vm1308, %v1301, %v1305
  %v1310 = vand.u32 2147483647, %v1195
  %vm1311 = vcmp.eq.f32.partialorder %v1310, 8.507059e+37
  %v1312 = vand.u32 %v1195, 2147483648
  %v1313 = vor.u32 1.1754944e-38, %v1312
  %v1314 = vsel %vm1311, %v1313, %v1309
  %v1315 = vmul.f32 %v1139, %v1314
  %v1316 = vpack.c.bf16 %v1210, %v1210
  %v1317 = vpack.c.bf16 %v1225, %v1225
  %v1318 = vpack.c.bf16 %v1240, %v1240
  %v1319 = vpack.c.bf16 %v1255, %v1255
  %v1320 = vpack.c.bf16 %v1270, %v1270
  %v1321 = vpack.c.bf16 %v1285, %v1285
  %v1322 = vpack.c.bf16 %v1300, %v1300
  %v1323 = vpack.c.bf16 %v1315, %v1315
  %1324 = vrot.lane.b32.xlu0 %v661, 48
  %v1325 = vpop.permute.xlu0 %1324
  %v1327 = vsel %vm394, %v1316, 0
  %v1330 = vsel %vm667, %v1325, 0
  %1332 = vmatpush.bf16.msra.mxu0 0
  %1333 = vmatpush.bf16.msra.mxu0 0
  %1334 = vmatpush.bf16.msra.mxu0 0
  %1335 = vmatpush.bf16.msra.mxu0 0
  %1336 = vmatpush.bf16.msra.mxu0 0
  %1337 = vmatpush.bf16.msra.mxu0 0
  %1338 = vmatpush.bf16.msra.mxu0 0
  %1339 = vmatpush.bf16.msra.mxu0 %v1330
  %1340 = vmatmul.bf16.gmra.mxu0 %v1327
  %v1341 = vpop.f32.mrf.mxu0
  %v1342 = vadd.f32 0.0, %v1341
  %v1343 = vpop.f32.mrf.mxu0
  %1344 = vdwg.mxu0
  %1345 = vrot.lane.b32.xlu0 %v686, 48
  %v1346 = vpop.permute.xlu0 %1345
  %v1348 = vsel %vm394, %v1317, 0
  %v1351 = vsel %vm667, %v1346, 0
  %1353 = vmatpush.bf16.msra.mxu0 0
  %1354 = vmatpush.bf16.msra.mxu0 0
  %1355 = vmatpush.bf16.msra.mxu0 0
  %1356 = vmatpush.bf16.msra.mxu0 0
  %1357 = vmatpush.bf16.msra.mxu0 0
  %1358 = vmatpush.bf16.msra.mxu0 0
  %1359 = vmatpush.bf16.msra.mxu0 0
  %1360 = vmatpush.bf16.msra.mxu0 %v1351
  %1361 = vmatmul.bf16.gmra.mxu0 %v1348
  %v1362 = vpop.f32.mrf.mxu0
  %v1363 = vadd.f32 0.0, %v1362
  %v1364 = vpop.f32.mrf.mxu0
  %1365 = vdwg.mxu0
  %1366 = vrot.lane.b32.xlu0 %v710, 48
  %v1367 = vpop.permute.xlu0 %1366
  %v1369 = vsel %vm394, %v1318, 0
  %v1372 = vsel %vm667, %v1367, 0
  %1374 = vmatpush.bf16.msra.mxu0 0
  %1375 = vmatpush.bf16.msra.mxu0 0
  %1376 = vmatpush.bf16.msra.mxu0 0
  %1377 = vmatpush.bf16.msra.mxu0 0
  %1378 = vmatpush.bf16.msra.mxu0 0
  %1379 = vmatpush.bf16.msra.mxu0 0
  %1380 = vmatpush.bf16.msra.mxu0 0
  %1381 = vmatpush.bf16.msra.mxu0 %v1372
  %1382 = vmatmul.bf16.gmra.mxu0 %v1369
  %v1383 = vpop.f32.mrf.mxu0
  %v1384 = vadd.f32 0.0, %v1383
  %v1385 = vpop.f32.mrf.mxu0
  %1386 = vdwg.mxu0
  %1387 = vrot.lane.b32.xlu0 %v734, 48
  %v1388 = vpop.permute.xlu0 %1387
  %v1390 = vsel %vm394, %v1319, 0
  %v1393 = vsel %vm667, %v1388, 0
  %1395 = vmatpush.bf16.msra.mxu0 0
  %1396 = vmatpush.bf16.msra.mxu0 0
  %1397 = vmatpush.bf16.msra.mxu0 0
  %1398 = vmatpush.bf16.msra.mxu0 0
  %1399 = vmatpush.bf16.msra.mxu0 0
  %1400 = vmatpush.bf16.msra.mxu0 0
  %1401 = vmatpush.bf16.msra.mxu0 0
  %1402 = vmatpush.bf16.msra.mxu0 %v1393
  %1403 = vmatmul.bf16.gmra.mxu0 %v1390
  %v1404 = vpop.f32.mrf.mxu0
  %v1405 = vadd.f32 0.0, %v1404
  %v1406 = vpop.f32.mrf.mxu0
  %1407 = vdwg.mxu0
  %1408 = vrot.lane.b32.xlu0 %v758, 48
  %v1409 = vpop.permute.xlu0 %1408
  %v1411 = vsel %vm394, %v1320, 0
  %v1414 = vsel %vm667, %v1409, 0
  %1416 = vmatpush.bf16.msra.mxu0 0
  %1417 = vmatpush.bf16.msra.mxu0 0
  %1418 = vmatpush.bf16.msra.mxu0 0
  %1419 = vmatpush.bf16.msra.mxu0 0
  %1420 = vmatpush.bf16.msra.mxu0 0
  %1421 = vmatpush.bf16.msra.mxu0 0
  %1422 = vmatpush.bf16.msra.mxu0 0
  %1423 = vmatpush.bf16.msra.mxu0 %v1414
  %1424 = vmatmul.bf16.gmra.mxu0 %v1411
  %v1425 = vpop.f32.mrf.mxu0
  %v1426 = vadd.f32 0.0, %v1425
  %v1427 = vpop.f32.mrf.mxu0
  %1428 = vdwg.mxu0
  %1429 = vrot.lane.b32.xlu0 %v782, 48
  %v1430 = vpop.permute.xlu0 %1429
  %v1432 = vsel %vm394, %v1321, 0
  %v1435 = vsel %vm667, %v1430, 0
  %1437 = vmatpush.bf16.msra.mxu0 0
  %1438 = vmatpush.bf16.msra.mxu0 0
  %1439 = vmatpush.bf16.msra.mxu0 0
  %1440 = vmatpush.bf16.msra.mxu0 0
  %1441 = vmatpush.bf16.msra.mxu0 0
  %1442 = vmatpush.bf16.msra.mxu0 0
  %1443 = vmatpush.bf16.msra.mxu0 0
  %1444 = vmatpush.bf16.msra.mxu0 %v1435
  %1445 = vmatmul.bf16.gmra.mxu0 %v1432
  %v1446 = vpop.f32.mrf.mxu0
  %v1447 = vadd.f32 0.0, %v1446
  %v1448 = vpop.f32.mrf.mxu0
  %1449 = vdwg.mxu0
  %1450 = vrot.lane.b32.xlu0 %v806, 48
  %v1451 = vpop.permute.xlu0 %1450
  %v1453 = vsel %vm394, %v1322, 0
  %v1456 = vsel %vm667, %v1451, 0
  %1458 = vmatpush.bf16.msra.mxu0 0
  %1459 = vmatpush.bf16.msra.mxu0 0
  %1460 = vmatpush.bf16.msra.mxu0 0
  %1461 = vmatpush.bf16.msra.mxu0 0
  %1462 = vmatpush.bf16.msra.mxu0 0
  %1463 = vmatpush.bf16.msra.mxu0 0
  %1464 = vmatpush.bf16.msra.mxu0 0
  %1465 = vmatpush.bf16.msra.mxu0 %v1456
  %1466 = vmatmul.bf16.gmra.mxu0 %v1453
  %v1467 = vpop.f32.mrf.mxu0
  %v1468 = vadd.f32 0.0, %v1467
  %v1469 = vpop.f32.mrf.mxu0
  %1470 = vdwg.mxu0
  %1471 = vrot.lane.b32.xlu0 %v830, 48
  %v1472 = vpop.permute.xlu0 %1471
  %v1474 = vsel %vm394, %v1323, 0
  %v1477 = vsel %vm667, %v1472, 0
  %1479 = vmatpush.bf16.msra.mxu0 0
  %1480 = vmatpush.bf16.msra.mxu0 0
  %1481 = vmatpush.bf16.msra.mxu0 0
  %1482 = vmatpush.bf16.msra.mxu0 0
  %1483 = vmatpush.bf16.msra.mxu0 0
  %1484 = vmatpush.bf16.msra.mxu0 0
  %1485 = vmatpush.bf16.msra.mxu0 0
  %1486 = vmatpush.bf16.msra.mxu0 %v1477
  %1487 = vmatmul.bf16.gmra.mxu0 %v1474
  %v1488 = vpop.f32.mrf.mxu0
  %v1489 = vadd.f32 0.0, %v1488
  %v1490 = vpop.f32.mrf.mxu0
  %1491 = vdwg.mxu0
  %1500 = vrot.lane.b32.xlu0 %v1342, 16
  %v1501 = vpop.permute.xlu0 %1500
  %1502 = vrot.lane.b32.xlu0 %v1363, 16
  %v1503 = vpop.permute.xlu0 %1502
  %1504 = vrot.lane.b32.xlu0 %v1384, 16
  %v1505 = vpop.permute.xlu0 %1504
  %1506 = vrot.lane.b32.xlu0 %v1405, 16
  %v1507 = vpop.permute.xlu0 %1506
  %1508 = vrot.lane.b32.xlu0 %v1426, 16
  %v1509 = vpop.permute.xlu0 %1508
  %1510 = vrot.lane.b32.xlu0 %v1447, 16
  %v1511 = vpop.permute.xlu0 %1510
  %1512 = vrot.lane.b32.xlu0 %v1468, 16
  %v1513 = vpop.permute.xlu0 %1512
  %1514 = vrot.lane.b32.xlu0 %v1489, 16
  %v1515 = vpop.permute.xlu0 %1514
  %v1524 = vsel %vm206, %v681, %v1501
  %v1525 = vsel %vm206, %v705, %v1503
  %v1526 = vsel %vm206, %v729, %v1505
  %v1527 = vsel %vm206, %v753, %v1507
  %v1528 = vsel %vm206, %v777, %v1509
  %v1529 = vsel %vm206, %v801, %v1511
  %v1530 = vsel %vm206, %v825, %v1513
  %v1531 = vsel %vm206, %v849, %v1515
  %v1532 = vpack.c.bf16 %v1525, %v1524
  %v1533 = vpack.c.bf16 %v1527, %v1526
  %v1534 = vpack.c.bf16 %v1529, %v1528
  %v1535 = vpack.c.bf16 %v1531, %v1530
  %v1536 = vld [vmem:[%s2] sm:$0xff]
  %v1537 = vld [vmem:[%s2 + $0x8] sm:$0xff]
  %v1538 = vld [vmem:[%s2 + $0x10] sm:$0xff]
  %v1539 = vld [vmem:[%s2 + $0x18] sm:$0xff]
  %v1540 = vpack.c.bf16 %v1537, %v1536
  %v1541 = vpack.c.bf16 %v1539, %v1538
  %v1543 = vsel %vm63, %v1532, 0
  %v1546 = vsel %vm63, %v1533, 0
  %v1549 = vsel %vm63, %v1534, 0
  %v1552 = vsel %vm63, %v1535, 0
  %1554 = vmatpush.bf16.msra.mxu0 0
  %1555 = vmatpush.bf16.msra.mxu0 0
  %1556 = vmatpush.bf16.msra.mxu0 0
  %1557 = vmatpush.bf16.msra.mxu0 0
  %1558 = vmatpush.bf16.msra.mxu0 0
  %1559 = vmatpush.bf16.msra.mxu0 0
  %1560 = vmatpush.bf16.msra.mxu0 %v1541
  %1561 = vmatpush.bf16.msra.mxu0 %v1540
  %1562 = vmatmul.bf16.gmra.mxu0 %v1543
  %v1563 = vpop.f32.mrf.mxu0
  %v1564 = vadd.f32 0.0, %v1563
  %v1565 = vpop.f32.mrf.mxu0
  %v1566 = vadd.f32 0.0, %v1565
  %1567 = vmatmul.bf16.gmra.mxu0 %v1546
  %v1568 = vpop.f32.mrf.mxu0
  %v1569 = vadd.f32 0.0, %v1568
  %v1570 = vpop.f32.mrf.mxu0
  %v1571 = vadd.f32 0.0, %v1570
  %1572 = vmatmul.bf16.gmra.mxu0 %v1549
  %v1573 = vpop.f32.mrf.mxu0
  %v1574 = vadd.f32 0.0, %v1573
  %v1575 = vpop.f32.mrf.mxu0
  %v1576 = vadd.f32 0.0, %v1575
  %1577 = vmatmul.bf16.gmra.mxu0 %v1552
  %v1578 = vpop.f32.mrf.mxu0
  %v1579 = vadd.f32 0.0, %v1578
  %v1580 = vpop.f32.mrf.mxu0
  %v1581 = vadd.f32 0.0, %v1580
  %1582 = vdwg.mxu0
  %v1583 = vadd.f32 %v21, %v1564
  %v1584 = vadd.f32 %v22, %v1566
  %v1585 = vadd.f32 %v23, %v1569
  %v1586 = vadd.f32 %v24, %v1571
  %v1587 = vadd.f32 %v25, %v1574
  %v1588 = vadd.f32 %v26, %v1576
  %v1589 = vadd.f32 %v27, %v1579
  %v1590 = vadd.f32 %v28, %v1581
  %v1591 = vsel %vm63, %v1583, 0.0
  %1592 = vadd.xlane.f32.xlu0 %v1591
  %v1593 = vpop.xlane.xlu0 %1592
  %v1594 = vsel %vm63, %v1584, 0.0
  %1595 = vadd.xlane.f32.xlu0 %v1594
  %v1596 = vpop.xlane.xlu0 %1595
  %v1597 = vsel %vm63, %v1585, 0.0
  %1598 = vadd.xlane.f32.xlu0 %v1597
  %v1599 = vpop.xlane.xlu0 %1598
  %v1600 = vsel %vm63, %v1586, 0.0
  %1601 = vadd.xlane.f32.xlu0 %v1600
  %v1602 = vpop.xlane.xlu0 %1601
  %v1603 = vsel %vm63, %v1587, 0.0
  %1604 = vadd.xlane.f32.xlu0 %v1603
  %v1605 = vpop.xlane.xlu0 %1604
  %v1606 = vsel %vm63, %v1588, 0.0
  %1607 = vadd.xlane.f32.xlu0 %v1606
  %v1608 = vpop.xlane.xlu0 %1607
  %v1609 = vsel %vm63, %v1589, 0.0
  %1610 = vadd.xlane.f32.xlu0 %v1609
  %v1611 = vpop.xlane.xlu0 %1610
  %v1612 = vsel %vm63, %v1590, 0.0
  %1613 = vadd.xlane.f32.xlu0 %v1612
  %v1614 = vpop.xlane.xlu0 %1613
  %v1615 = vrcp.pop 32.0
  %v1616 = vmul.f32 32.0, %v1615
  %v1617 = vsub.f32 1.0, %v1616
  %v1618 = vmul.f32 %v1615, %v1617
  %v1619 = vadd.f32 %v1615, %v1618
  %vm1620 = vweird.f32 %v1615
  %v1621 = vsel %vm1620, %v1615, %v1619
  %v1622 = vmul.f32 %v1593, %v1621
  %v1623 = vmul.f32 %v1596, %v1621
  %v1624 = vmul.f32 %v1599, %v1621
  %v1625 = vmul.f32 %v1602, %v1621
  %v1626 = vmul.f32 %v1605, %v1621
  %v1627 = vmul.f32 %v1608, %v1621
  %v1628 = vmul.f32 %v1611, %v1621
  %v1629 = vmul.f32 %v1614, %v1621
  %v1630 = vsub.f32 %v1583, %v1622
  %v1631 = vsub.f32 %v1584, %v1623
  %v1632 = vsub.f32 %v1585, %v1624
  %v1633 = vsub.f32 %v1586, %v1625
  %v1634 = vsub.f32 %v1587, %v1626
  %v1635 = vsub.f32 %v1588, %v1627
  %v1636 = vsub.f32 %v1589, %v1628
  %v1637 = vsub.f32 %v1590, %v1629
  %v1638 = vmul.f32 %v1630, %v1630
  %v1639 = vmul.f32 %v1631, %v1631
  %v1640 = vmul.f32 %v1632, %v1632
  %v1641 = vmul.f32 %v1633, %v1633
  %v1642 = vmul.f32 %v1634, %v1634
  %v1643 = vmul.f32 %v1635, %v1635
  %v1644 = vmul.f32 %v1636, %v1636
  %v1645 = vmul.f32 %v1637, %v1637
  %v1646 = vsel %vm63, %v1638, 0.0
  %1647 = vadd.xlane.f32.xlu0 %v1646
  %v1648 = vpop.xlane.xlu0 %1647
  %v1649 = vsel %vm63, %v1639, 0.0
  %1650 = vadd.xlane.f32.xlu0 %v1649
  %v1651 = vpop.xlane.xlu0 %1650
  %v1652 = vsel %vm63, %v1640, 0.0
  %1653 = vadd.xlane.f32.xlu0 %v1652
  %v1654 = vpop.xlane.xlu0 %1653
  %v1655 = vsel %vm63, %v1641, 0.0
  %1656 = vadd.xlane.f32.xlu0 %v1655
  %v1657 = vpop.xlane.xlu0 %1656
  %v1658 = vsel %vm63, %v1642, 0.0
  %1659 = vadd.xlane.f32.xlu0 %v1658
  %v1660 = vpop.xlane.xlu0 %1659
  %v1661 = vsel %vm63, %v1643, 0.0
  %1662 = vadd.xlane.f32.xlu0 %v1661
  %v1663 = vpop.xlane.xlu0 %1662
  %v1664 = vsel %vm63, %v1644, 0.0
  %1665 = vadd.xlane.f32.xlu0 %v1664
  %v1666 = vpop.xlane.xlu0 %1665
  %v1667 = vsel %vm63, %v1645, 0.0
  %1668 = vadd.xlane.f32.xlu0 %v1667
  %v1669 = vpop.xlane.xlu0 %1668
  %v1670 = vmul.f32 %v1648, %v1621
  %v1671 = vmul.f32 %v1651, %v1621
  %v1672 = vmul.f32 %v1654, %v1621
  %v1673 = vmul.f32 %v1657, %v1621
  %v1674 = vmul.f32 %v1660, %v1621
  %v1675 = vmul.f32 %v1663, %v1621
  %v1676 = vmul.f32 %v1666, %v1621
  %v1677 = vmul.f32 %v1669, %v1621
  %v1678 = vadd.f32 %v1670, 1e-05
  %v1679 = vadd.f32 %v1671, 1e-05
  %v1680 = vadd.f32 %v1672, 1e-05
  %v1681 = vadd.f32 %v1673, 1e-05
  %v1682 = vadd.f32 %v1674, 1e-05
  %v1683 = vadd.f32 %v1675, 1e-05
  %v1684 = vadd.f32 %v1676, 1e-05
  %v1685 = vadd.f32 %v1677, 1e-05
  %v1686 = vrsqrt.pop %v1678
  %v1687 = vmul.f32 %v1686, %v1678
  %v1688 = vmul.f32 %v1687, %v1686
  %v1689 = vmul.f32 0.5, %v1688
  %v1690 = vsub.f32 1.5, %v1689
  %v1691 = vmul.f32 %v1686, %v1690
  %vm1692 = vweird.f32 %v1678
  %vm1693 = vweird.f32 %v1686
  %vm1694 = vmor %vm1692, %vm1693
  %v1695 = vsel %vm1694, %v1686, %v1691
  %v1696 = vrsqrt.pop %v1679
  %v1697 = vmul.f32 %v1696, %v1679
  %v1698 = vmul.f32 %v1697, %v1696
  %v1699 = vmul.f32 0.5, %v1698
  %v1700 = vsub.f32 1.5, %v1699
  %v1701 = vmul.f32 %v1696, %v1700
  %vm1702 = vweird.f32 %v1679
  %vm1703 = vweird.f32 %v1696
  %vm1704 = vmor %vm1702, %vm1703
  %v1705 = vsel %vm1704, %v1696, %v1701
  %v1706 = vrsqrt.pop %v1680
  %v1707 = vmul.f32 %v1706, %v1680
  %v1708 = vmul.f32 %v1707, %v1706
  %v1709 = vmul.f32 0.5, %v1708
  %v1710 = vsub.f32 1.5, %v1709
  %v1711 = vmul.f32 %v1706, %v1710
  %vm1712 = vweird.f32 %v1680
  %vm1713 = vweird.f32 %v1706
  %vm1714 = vmor %vm1712, %vm1713
  %v1715 = vsel %vm1714, %v1706, %v1711
  %v1716 = vrsqrt.pop %v1681
  %v1717 = vmul.f32 %v1716, %v1681
  %v1718 = vmul.f32 %v1717, %v1716
  %v1719 = vmul.f32 0.5, %v1718
  %v1720 = vsub.f32 1.5, %v1719
  %v1721 = vmul.f32 %v1716, %v1720
  %vm1722 = vweird.f32 %v1681
  %vm1723 = vweird.f32 %v1716
  %vm1724 = vmor %vm1722, %vm1723
  %v1725 = vsel %vm1724, %v1716, %v1721
  %v1726 = vrsqrt.pop %v1682
  %v1727 = vmul.f32 %v1726, %v1682
  %v1728 = vmul.f32 %v1727, %v1726
  %v1729 = vmul.f32 0.5, %v1728
  %v1730 = vsub.f32 1.5, %v1729
  %v1731 = vmul.f32 %v1726, %v1730
  %vm1732 = vweird.f32 %v1682
  %vm1733 = vweird.f32 %v1726
  %vm1734 = vmor %vm1732, %vm1733
  %v1735 = vsel %vm1734, %v1726, %v1731
  %v1736 = vrsqrt.pop %v1683
  %v1737 = vmul.f32 %v1736, %v1683
  %v1738 = vmul.f32 %v1737, %v1736
  %v1739 = vmul.f32 0.5, %v1738
  %v1740 = vsub.f32 1.5, %v1739
  %v1741 = vmul.f32 %v1736, %v1740
  %vm1742 = vweird.f32 %v1683
  %vm1743 = vweird.f32 %v1736
  %vm1744 = vmor %vm1742, %vm1743
  %v1745 = vsel %vm1744, %v1736, %v1741
  %v1746 = vrsqrt.pop %v1684
  %v1747 = vmul.f32 %v1746, %v1684
  %v1748 = vmul.f32 %v1747, %v1746
  %v1749 = vmul.f32 0.5, %v1748
  %v1750 = vsub.f32 1.5, %v1749
  %v1751 = vmul.f32 %v1746, %v1750
  %vm1752 = vweird.f32 %v1684
  %vm1753 = vweird.f32 %v1746
  %vm1754 = vmor %vm1752, %vm1753
  %v1755 = vsel %vm1754, %v1746, %v1751
  %v1756 = vrsqrt.pop %v1685
  %v1757 = vmul.f32 %v1756, %v1685
  %v1758 = vmul.f32 %v1757, %v1756
  %v1759 = vmul.f32 0.5, %v1758
  %v1760 = vsub.f32 1.5, %v1759
  %v1761 = vmul.f32 %v1756, %v1760
  %vm1762 = vweird.f32 %v1685
  %vm1763 = vweird.f32 %v1756
  %vm1764 = vmor %vm1762, %vm1763
  %v1765 = vsel %vm1764, %v1756, %v1761
  %v1766 = vmul.f32 %v1630, %v1695
  %v1767 = vmul.f32 %v1631, %v1705
  %v1768 = vmul.f32 %v1632, %v1715
  %v1769 = vmul.f32 %v1633, %v1725
  %v1770 = vmul.f32 %v1634, %v1735
  %v1771 = vmul.f32 %v1635, %v1745
  %v1772 = vmul.f32 %v1636, %v1755
  %v1773 = vmul.f32 %v1637, %v1765
  %v1774 = vld [vmem:[%s3] sm:$0x1]
  %v1776 = vperm.slane %v1774, 0
  %v1778 = vmul.f32 %v1766, %v1776
  %v1779 = vmul.f32 %v1767, %v1776
  %v1780 = vmul.f32 %v1768, %v1776
  %v1781 = vmul.f32 %v1769, %v1776
  %v1782 = vmul.f32 %v1770, %v1776
  %v1783 = vmul.f32 %v1771, %v1776
  %v1784 = vmul.f32 %v1772, %v1776
  %v1785 = vmul.f32 %v1773, %v1776
  %v1786 = vld [vmem:[%s4] sm:$0x1]
  %v1788 = vperm.slane %v1786, 0
  %v1790 = vadd.f32 %v1778, %v1788
  %v1791 = vadd.f32 %v1779, %v1788
  %v1792 = vadd.f32 %v1780, %v1788
  %v1793 = vadd.f32 %v1781, %v1788
  %v1794 = vadd.f32 %v1782, %v1788
  %v1795 = vadd.f32 %v1783, %v1788
  %v1796 = vadd.f32 %v1784, %v1788
  %v1797 = vadd.f32 %v1785, %v1788
  %1798 = vst.msk [vmem:[#allocation2] sm:$0xff] %vm63, %v1790
  %1799 = vst.msk [vmem:[#allocation2 + $0x8] sm:$0xff] %vm63, %v1791
  %1800 = vst.msk [vmem:[#allocation2 + $0x10] sm:$0xff] %vm63, %v1792
  %1801 = vst.msk [vmem:[#allocation2 + $0x18] sm:$0xff] %vm63, %v1793
  %1802 = vst.msk [vmem:[#allocation2 + $0x20] sm:$0xff] %vm63, %v1794
  %1803 = vst.msk [vmem:[#allocation2 + $0x28] sm:$0xff] %vm63, %v1795
  %1804 = vst.msk [vmem:[#allocation2 + $0x30] sm:$0xff] %vm63, %v1796
  %1805 = vst.msk [vmem:[#allocation2 + $0x38] sm:$0xff] %vm63, %v1797
  %v1806 = vld [vmem:[#allocation2] sm:$0x1]
  %v1807 = vld [vmem:[#allocation2 + $0x8] sm:$0x1]
  %v1808 = vld [vmem:[#allocation2 + $0x10] sm:$0x1]
  %v1809 = vld [vmem:[#allocation2 + $0x18] sm:$0x1]
  %v1810 = vld [vmem:[#allocation2 + $0x20] sm:$0x1]
  %v1811 = vld [vmem:[#allocation2 + $0x28] sm:$0x1]
  %v1812 = vld [vmem:[#allocation2 + $0x30] sm:$0x1]
  %v1813 = vld [vmem:[#allocation2 + $0x38] sm:$0x1]
  %v1814 = vld [vmem:[#allocation2 + $0x1] sm:$0x1]
  %v1815 = vld [vmem:[#allocation2 + $0x9] sm:$0x1]
  %v1816 = vld [vmem:[#allocation2 + $0x11] sm:$0x1]
  %v1817 = vld [vmem:[#allocation2 + $0x19] sm:$0x1]
  %v1818 = vld [vmem:[#allocation2 + $0x21] sm:$0x1]
  %v1819 = vld [vmem:[#allocation2 + $0x29] sm:$0x1]
  %v1820 = vld [vmem:[#allocation2 + $0x31] sm:$0x1]
  %v1821 = vld [vmem:[#allocation2 + $0x39] sm:$0x1]
  %v1822 = vld [vmem:[#allocation2 + $0x2] sm:$0x1]
  %v1823 = vld [vmem:[#allocation2 + $0xa] sm:$0x1]
  %v1824 = vld [vmem:[#allocation2 + $0x12] sm:$0x1]
  %v1825 = vld [vmem:[#allocation2 + $0x1a] sm:$0x1]
  %v1826 = vld [vmem:[#allocation2 + $0x22] sm:$0x1]
  %v1827 = vld [vmem:[#allocation2 + $0x2a] sm:$0x1]
  %v1828 = vld [vmem:[#allocation2 + $0x32] sm:$0x1]
  %v1829 = vld [vmem:[#allocation2 + $0x3a] sm:$0x1]
  %v1830 = vld [vmem:[#allocation2 + $0x3] sm:$0x1]
  %v1831 = vld [vmem:[#allocation2 + $0xb] sm:$0x1]
  %v1832 = vld [vmem:[#allocation2 + $0x13] sm:$0x1]
  %v1833 = vld [vmem:[#allocation2 + $0x1b] sm:$0x1]
  %v1834 = vld [vmem:[#allocation2 + $0x23] sm:$0x1]
  %v1835 = vld [vmem:[#allocation2 + $0x2b] sm:$0x1]
  %v1836 = vld [vmem:[#allocation2 + $0x33] sm:$0x1]
  %v1837 = vld [vmem:[#allocation2 + $0x3b] sm:$0x1]
  %v1838 = vld [vmem:[#allocation2 + $0x4] sm:$0x1]
  %v1839 = vld [vmem:[#allocation2 + $0xc] sm:$0x1]
  %v1840 = vld [vmem:[#allocation2 + $0x14] sm:$0x1]
  %v1841 = vld [vmem:[#allocation2 + $0x1c] sm:$0x1]
  %v1842 = vld [vmem:[#allocation2 + $0x24] sm:$0x1]
  %v1843 = vld [vmem:[#allocation2 + $0x2c] sm:$0x1]
  %v1844 = vld [vmem:[#allocation2 + $0x34] sm:$0x1]
  %v1845 = vld [vmem:[#allocation2 + $0x3c] sm:$0x1]
  %v1846 = vld [vmem:[#allocation2 + $0x5] sm:$0x1]
  %v1847 = vld [vmem:[#allocation2 + $0xd] sm:$0x1]
  %v1848 = vld [vmem:[#allocation2 + $0x15] sm:$0x1]
  %v1849 = vld [vmem:[#allocation2 + $0x1d] sm:$0x1]
  %v1850 = vld [vmem:[#allocation2 + $0x25] sm:$0x1]
  %v1851 = vld [vmem:[#allocation2 + $0x2d] sm:$0x1]
  %v1852 = vld [vmem:[#allocation2 + $0x35] sm:$0x1]
  %v1853 = vld [vmem:[#allocation2 + $0x3d] sm:$0x1]
  %v1854 = vld [vmem:[#allocation2 + $0x6] sm:$0x1]
  %v1855 = vld [vmem:[#allocation2 + $0xe] sm:$0x1]
  %v1856 = vld [vmem:[#allocation2 + $0x16] sm:$0x1]
  %v1857 = vld [vmem:[#allocation2 + $0x1e] sm:$0x1]
  %v1858 = vld [vmem:[#allocation2 + $0x26] sm:$0x1]
  %v1859 = vld [vmem:[#allocation2 + $0x2e] sm:$0x1]
  %v1860 = vld [vmem:[#allocation2 + $0x36] sm:$0x1]
  %v1861 = vld [vmem:[#allocation2 + $0x3e] sm:$0x1]
  %v1862 = vld [vmem:[#allocation2 + $0x7] sm:$0x1]
  %v1863 = vld [vmem:[#allocation2 + $0xf] sm:$0x1]
  %v1864 = vld [vmem:[#allocation2 + $0x17] sm:$0x1]
  %v1865 = vld [vmem:[#allocation2 + $0x1f] sm:$0x1]
  %v1866 = vld [vmem:[#allocation2 + $0x27] sm:$0x1]
  %v1867 = vld [vmem:[#allocation2 + $0x2f] sm:$0x1]
  %v1868 = vld [vmem:[#allocation2 + $0x37] sm:$0x1]
  %v1869 = vld [vmem:[#allocation2 + $0x3f] sm:$0x1]
  %v1878 = vrot.slane %v1807, 7
  %vm1879 = vcmask 1041409
  %v1880 = vsel %vm1879, %v1878, %v1806
  %v1881 = vrot.slane %v1808, 6
  %vm1882 = vcmask 1042434
  %v1883 = vsel %vm1882, %v1881, %v1880
  %v1884 = vrot.slane %v1809, 5
  %vm1885 = vcmask 1043459
  %v1886 = vsel %vm1885, %v1884, %v1883
  %v1887 = vrot.slane %v1810, 4
  %vm1888 = vcmask 1044484
  %v1889 = vsel %vm1888, %v1887, %v1886
  %v1890 = vrot.slane %v1811, 3
  %vm1891 = vcmask 1045509
  %v1892 = vsel %vm1891, %v1890, %v1889
  %v1893 = vrot.slane %v1812, 2
  %vm1894 = vcmask 1046534
  %v1895 = vsel %vm1894, %v1893, %v1892
  %v1896 = vrot.slane %v1813, 1
  %vm1897 = vcmask 1047559
  %v1898 = vsel %vm1897, %v1896, %v1895
  %v1908 = vrot.slane %v1815, 7
  %v1909 = vsel %vm1879, %v1908, %v1814
  %v1910 = vrot.slane %v1816, 6
  %v1911 = vsel %vm1882, %v1910, %v1909
  %v1912 = vrot.slane %v1817, 5
  %v1913 = vsel %vm1885, %v1912, %v1911
  %v1914 = vrot.slane %v1818, 4
  %v1915 = vsel %vm1888, %v1914, %v1913
  %v1916 = vrot.slane %v1819, 3
  %v1917 = vsel %vm1891, %v1916, %v1915
  %v1918 = vrot.slane %v1820, 2
  %v1919 = vsel %vm1894, %v1918, %v1917
  %v1920 = vrot.slane %v1821, 1
  %v1921 = vsel %vm1897, %v1920, %v1919
  %1922 = vrot.lane.b32.xlu0 %v1921, 32
  %v1923 = vpop.permute.xlu0 %1922
  %v1933 = vrot.slane %v1823, 7
  %v1934 = vsel %vm1879, %v1933, %v1822
  %v1935 = vrot.slane %v1824, 6
  %v1936 = vsel %vm1882, %v1935, %v1934
  %v1937 = vrot.slane %v1825, 5
  %v1938 = vsel %vm1885, %v1937, %v1936
  %v1939 = vrot.slane %v1826, 4
  %v1940 = vsel %vm1888, %v1939, %v1938
  %v1941 = vrot.slane %v1827, 3
  %v1942 = vsel %vm1891, %v1941, %v1940
  %v1943 = vrot.slane %v1828, 2
  %v1944 = vsel %vm1894, %v1943, %v1942
  %v1945 = vrot.slane %v1829, 1
  %v1946 = vsel %vm1897, %v1945, %v1944
  %1947 = vrot.lane.b32.xlu0 %v1946, 64
  %v1948 = vpop.permute.xlu0 %1947
  %v1958 = vrot.slane %v1831, 7
  %v1959 = vsel %vm1879, %v1958, %v1830
  %v1960 = vrot.slane %v1832, 6
  %v1961 = vsel %vm1882, %v1960, %v1959
  %v1962 = vrot.slane %v1833, 5
  %v1963 = vsel %vm1885, %v1962, %v1961
  %v1964 = vrot.slane %v1834, 4
  %v1965 = vsel %vm1888, %v1964, %v1963
  %v1966 = vrot.slane %v1835, 3
  %v1967 = vsel %vm1891, %v1966, %v1965
  %v1968 = vrot.slane %v1836, 2
  %v1969 = vsel %vm1894, %v1968, %v1967
  %v1970 = vrot.slane %v1837, 1
  %v1971 = vsel %vm1897, %v1970, %v1969
  %1972 = vrot.lane.b32.xlu0 %v1971, 96
  %v1973 = vpop.permute.xlu0 %1972
  %v1983 = vrot.slane %v1839, 7
  %v1984 = vsel %vm1879, %v1983, %v1838
  %v1985 = vrot.slane %v1840, 6
  %v1986 = vsel %vm1882, %v1985, %v1984
  %v1987 = vrot.slane %v1841, 5
  %v1988 = vsel %vm1885, %v1987, %v1986
  %v1989 = vrot.slane %v1842, 4
  %v1990 = vsel %vm1888, %v1989, %v1988
  %v1991 = vrot.slane %v1843, 3
  %v1992 = vsel %vm1891, %v1991, %v1990
  %v1993 = vrot.slane %v1844, 2
  %v1994 = vsel %vm1894, %v1993, %v1992
  %v1995 = vrot.slane %v1845, 1
  %v1996 = vsel %vm1897, %v1995, %v1994
  %v2006 = vrot.slane %v1847, 7
  %v2007 = vsel %vm1879, %v2006, %v1846
  %v2008 = vrot.slane %v1848, 6
  %v2009 = vsel %vm1882, %v2008, %v2007
  %v2010 = vrot.slane %v1849, 5
  %v2011 = vsel %vm1885, %v2010, %v2009
  %v2012 = vrot.slane %v1850, 4
  %v2013 = vsel %vm1888, %v2012, %v2011
  %v2014 = vrot.slane %v1851, 3
  %v2015 = vsel %vm1891, %v2014, %v2013
  %v2016 = vrot.slane %v1852, 2
  %v2017 = vsel %vm1894, %v2016, %v2015
  %v2018 = vrot.slane %v1853, 1
  %v2019 = vsel %vm1897, %v2018, %v2017
  %2020 = vrot.lane.b32.xlu0 %v2019, 32
  %v2021 = vpop.permute.xlu0 %2020
  %v2031 = vrot.slane %v1855, 7
  %v2032 = vsel %vm1879, %v2031, %v1854
  %v2033 = vrot.slane %v1856, 6
  %v2034 = vsel %vm1882, %v2033, %v2032
  %v2035 = vrot.slane %v1857, 5
  %v2036 = vsel %vm1885, %v2035, %v2034
  %v2037 = vrot.slane %v1858, 4
  %v2038 = vsel %vm1888, %v2037, %v2036
  %v2039 = vrot.slane %v1859, 3
  %v2040 = vsel %vm1891, %v2039, %v2038
  %v2041 = vrot.slane %v1860, 2
  %v2042 = vsel %vm1894, %v2041, %v2040
  %v2043 = vrot.slane %v1861, 1
  %v2044 = vsel %vm1897, %v2043, %v2042
  %2045 = vrot.lane.b32.xlu0 %v2044, 64
  %v2046 = vpop.permute.xlu0 %2045
  %v2056 = vrot.slane %v1863, 7
  %v2057 = vsel %vm1879, %v2056, %v1862
  %v2058 = vrot.slane %v1864, 6
  %v2059 = vsel %vm1882, %v2058, %v2057
  %v2060 = vrot.slane %v1865, 5
  %v2061 = vsel %vm1885, %v2060, %v2059
  %v2062 = vrot.slane %v1866, 4
  %v2063 = vsel %vm1888, %v2062, %v2061
  %v2064 = vrot.slane %v1867, 3
  %v2065 = vsel %vm1891, %v2064, %v2063
  %v2066 = vrot.slane %v1868, 2
  %v2067 = vsel %vm1894, %v2066, %v2065
  %v2068 = vrot.slane %v1869, 1
  %v2069 = vsel %vm1897, %v2068, %v2067
  %2070 = vrot.lane.b32.xlu0 %v2069, 96
  %v2071 = vpop.permute.xlu0 %2070
  %v2073 = vsel %vm63, %v1898, %v1923
  %vm2074 = vcmask 523264
  %v2075 = vsel %vm2074, %v2073, %v1948
  %vm2076 = vcmask 785408
  %v2077 = vsel %vm2076, %v2075, %v1973
  %v2078 = vsel %vm63, %v1996, %v2021
  %v2079 = vsel %vm2074, %v2078, %v2046
  %v2080 = vsel %vm2076, %v2079, %v2071
  %2081 = vst [vmem:[%s5] sm:$0xff] %v2077
  %2082 = vst [vmem:[%s5 + $0x8] sm:$0xff] %v2080
  // Predicated region
  $region22: #{multi_head_attention.1} parent=0 // pred_check
    _
  $region23: #{multi_head_attention.1} parent=0 // pred_check_branch
    %2084 = sbr.rel (0) target = $region25
  $region24: #{multi_head_attention.1} parent=0 // pred_region
    _
  $region25: #{multi_head_attention.1} parent=0 // pred_fallthru
    _
  // Predicated region
  $region26: #{multi_head_attention.1} parent=0 // pred_check
    _
  $region27: #{multi_head_attention.1} parent=0 // pred_check_branch
    %2086 = sbr.rel (0) target = $region29
  $region28: #{multi_head_attention.1} parent=0 // pred_region
    _
  $region29: #{multi_head_attention.1} parent=0 // pred_fallthru
    _

</llo_original>
